<compile_context>
chip_gen: v7x
topology: tpu7x:2x2x1
jax: 0.10.0
libtpu: 0.0.40
codegen_flags: <defaults>
</compile_context>

<pallas_src>
import jax
import jax.numpy as jnp
from jax import lax
from jax.experimental import pallas as pl
from jax.experimental.pallas import tpu as pltpu

EPS = 1e-5


def _vmem_limit_bytes():
    """Generation-aware scoped-VMEM budget (~3/4 of physical VMEM)."""
    try:
        phys = int(pltpu.get_tpu_info().vmem_capacity_bytes)
        return max(32 << 20, min((phys * 3) // 4, 96 << 20))
    except Exception:  # conservative fallback if the query is unavailable
        return 32 << 20


# ---------------------------------------------------------------------------
# Wrapper-side weight preparation (pure XLA, done once)
# ---------------------------------------------------------------------------
def _banded_weights(w_oihw, W):
    """PyTorch (O, I, 3, 3) conv weight -> (3, W*I, W*O) banded matrices.

    B[ky][(x', ci), (w, co)] = w[co, ci, ky, x'-w+1]  when |x'-w| <= 1, else 0,
    so that   out_row(h)[(w,co)] = sum_ky  x_row(h+ky-1)[(x',ci)] @ B[ky]
    implements the 3x3 'SAME' conv (x-direction zero padding is handled by the
    band truncation at the row edges).
    """
    wt = jnp.transpose(w_oihw, (2, 3, 1, 0))                 # (ky, kx, ci, co)
    O, I = w_oihw.shape[0], w_oihw.shape[1]
    xs = jnp.arange(W)
    kx = xs[:, None] - xs[None, :] + 1                       # (x', w)
    valid = ((kx >= 0) & (kx <= 2)).astype(wt.dtype)
    taps = wt[:, jnp.clip(kx, 0, 2), :, :]                   # (3, x', w, ci, co)
    taps = taps * valid[None, :, :, None, None]
    return jnp.transpose(taps, (0, 1, 3, 2, 4)).reshape(3, W * I, W * O)


def _channel_pool(W, C):
    """(W*C, W*C) 0/1 projector: (rowvec @ P)[(w',c')] = sum_w rowvec[(w,c')]."""
    return jnp.tile(jnp.eye(C, dtype=jnp.float32), (W, W))


def _tile_channels(v, W):
    """(C,) per-channel vector -> (1, W*C) row matching the (w, c) column layout."""
    return jnp.tile(v.reshape(1, -1), (1, W)).astype(jnp.float32)


# ---------------------------------------------------------------------------
# Fused kernel
# ---------------------------------------------------------------------------
def _make_kernel(N, H, W, C):
    WC = W * C
    HP = H + 2          # wrapper provides a 1-row halo above/below each image
    YB = H + 16         # y scratch: 8 zero rows above/below -> 8-aligned stores
    inv_m = 1.0 / (N * H * W)

    def kernel(xpad_ref, b1_ref, b2_ref, pool_ref,
               g1_ref, be1_ref, g2_ref, be2_ref,
               out_ref, ypad_ref, acc_ref):

        def conv3x3_rows(src_ref, row0, b_ref):
            """One image: 3 row-shifted banded bf16 MXU matmuls, f32 accum."""
            acc = None
            for ky in range(3):
                slab = src_ref[pl.ds(row0 + ky, H), :].astype(jnp.bfloat16)
                d = jnp.dot(slab, b_ref[ky], preferred_element_type=jnp.float32)
                acc = d if acc is None else acc + d
            return acc

        def bn_scale_shift(acc, g_ref, be_ref):
            """Train-mode BN folded to per-(w,c)-column scale/shift (two-pass)."""
            pool = pool_ref[...]
            colsum = jnp.sum(acc, axis=0, keepdims=True)                 # (1, WC)
            mean = jnp.dot(colsum, pool,
                           preferred_element_type=jnp.float32) * inv_m   # bcast
            centered = acc - mean
            colsq = jnp.sum(centered * centered, axis=0, keepdims=True)  # (1, WC)
            var = jnp.dot(colsq, pool,
                          preferred_element_type=jnp.float32) * inv_m
            scale = g_ref[...] * lax.rsqrt(var + EPS)
            shift = be_ref[...] - mean * scale
            return scale, shift

        # ---- conv1 (bias dropped: exactly cancelled by the BN mean) ----
        for n in range(N):
            acc_ref[pl.ds(n * H, H), :] = conv3x3_rows(xpad_ref, n * HP, b1_ref)

        # ---- bn1 + relu -> stage y in zero-padded VMEM (never leaves chip) ----
        acc1 = acc_ref[...]
        scale1, shift1 = bn_scale_shift(acc1, g1_ref, be1_ref)
        y = jnp.maximum(acc1 * scale1 + shift1, 0.0)

        ypad_ref[...] = jnp.zeros_like(ypad_ref)
        for n in range(N):
            ypad_ref[pl.ds(n * YB + 8, H), :] = y[n * H:(n + 1) * H, :]

        # ---- conv2 (reads the resident, zero-padded y scratch) ----
        for n in range(N):
            acc_ref[pl.ds(n * H, H), :] = conv3x3_rows(ypad_ref, n * YB + 7, b2_ref)

        # ---- bn2 + residual add ----
        acc2 = acc_ref[...]
        scale2, shift2 = bn_scale_shift(acc2, g2_ref, be2_ref)
        res = acc2 * scale2 + shift2
        for n in range(N):
            out_ref[pl.ds(n * H, H), :] = (
                xpad_ref[pl.ds(n * HP + 1, H), :] + res[n * H:(n + 1) * H, :])

    return kernel


# ---------------------------------------------------------------------------
# Wrapper
# ---------------------------------------------------------------------------
def residual_block(x_nhwc, params):
    """Forward of ResidualBlock on an NHWC f32 input; returns NHWC f32."""
    N, H, W, C = x_nhwc.shape
    WC = W * C

    # Only a 1-row h-halo is materialised host-side (x padding lives inside the
    # banded weights): activation read once, ~(H+2)/H inflation instead of the
    # previous 9x im2col blow-up.
    xpad = jnp.pad(x_nhwc, ((0, 0), (1, 1), (0, 0), (0, 0)))
    xpad = xpad.reshape(N * (H + 2), WC).astype(jnp.float32)

    out = pl.pallas_call(
        _make_kernel(N, H, W, C),
        out_shape=jax.ShapeDtypeStruct((N * H, WC), jnp.float32),
        scratch_shapes=[
            pltpu.VMEM((N * (H + 16), WC), jnp.float32),   # zero-padded y
            pltpu.VMEM((N * H, WC), jnp.float32),          # conv accumulator
        ],
        compiler_params=pltpu.CompilerParams(
            vmem_limit_bytes=_vmem_limit_bytes()),
    )(xpad, params["b1m"], params["b2m"], params["pool"],
      params["g1c"], params["be1c"], params["g2c"], params["be2c"])

    return out.reshape(N, H, W, C)


# ---------------------------------------------------------------------------
# Pure-JAX reference (f32 lax.conv, includes conv biases)
# ---------------------------------------------------------------------------
def ref_residual_block(x, p):
    C = x.shape[-1]

    def conv(h, w_oihw, b):
        w = jnp.transpose(w_oihw, (2, 3, 1, 0))              # OIHW -> HWIO
        y = lax.conv_general_dilated(h, w, (1, 1), "SAME",
                                     dimension_numbers=("NHWC", "HWIO", "NHWC"))
        return y + b.reshape(1, 1, 1, C)

    def bn(y, g, be):
        m = jnp.mean(y, axis=(0, 1, 2), keepdims=True)
        v = jnp.mean((y - m) ** 2, axis=(0, 1, 2), keepdims=True)
        return (y - m) * lax.rsqrt(v + EPS) * g.reshape(1, 1, 1, C) \
            + be.reshape(1, 1, 1, C)

    r = conv(x, p["w1"], p["b1"])
    r = jnp.maximum(bn(r, p["g1"], p["be1"]), 0.0)
    r = conv(r, p["w2"], p["b2"])
    r = bn(r, p["g2"], p["be2"])
    return x + r


# ---------------------------------------------------------------------------
if __name__ == "__main__":
    key = jax.random.PRNGKey(0)
    N, C, H, W = 2, 4, 16, 16                     # PyTorch-style NCHW shape
    ks = jax.random.split(key, 9)

    x_nchw = jax.random.normal(ks[0], (N, C, H, W), jnp.float32)
    x_nhwc = jnp.transpose(x_nchw, (0, 2, 3, 1))

    # Parameters in PyTorch layouts (Conv2d OIHW weight + bias; BN2d affine).
    w1 = jax.random.normal(ks[1], (C, C, 3, 3), jnp.float32) * 0.1
    b1 = jax.random.normal(ks[2], (C,), jnp.float32) * 0.1
    w2 = jax.random.normal(ks[3], (C, C, 3, 3), jnp.float32) * 0.1
    b2 = jax.random.normal(ks[4], (C,), jnp.float32) * 0.1
    g1 = 1.0 + 0.1 * jax.random.normal(ks[5], (C,), jnp.float32)
    be1 = 0.1 * jax.random.normal(ks[6], (C,), jnp.float32)
    g2 = 1.0 + 0.1 * jax.random.normal(ks[7], (C,), jnp.float32)
    be2 = 0.1 * jax.random.normal(ks[8], (C,), jnp.float32)

    params = {
        # reference-side (PyTorch layout, biases included)
        "w1": w1, "b1": b1, "w2": w2, "b2": b2,
        "g1": g1, "be1": be1, "g2": g2, "be2": be2,
        # kernel-side: banded bf16 conv matrices, BN channel-pool projector and
        # per-(w,c)-column tiled gamma/beta.  Conv biases are dropped (exactly
        # cancelled by training-mode BN mean subtraction).
        "b1m": _banded_weights(w1, W).astype(jnp.bfloat16),
        "b2m": _banded_weights(w2, W).astype(jnp.bfloat16),
        "pool": _channel_pool(W, C),
        "g1c": _tile_channels(g1, W), "be1c": _tile_channels(be1, W),
        "g2c": _tile_channels(g2, W), "be2c": _tile_channels(be2, W),
    }

    out = jax.block_until_ready(residual_block(x_nhwc, params))
    ref = ref_residual_block(x_nhwc, params)

    assert out.shape == (N, H, W, C)
    # bf16 MXU operands vs. the all-f32 reference -> looser (still tight) tol.
    assert jnp.allclose(out, ref, atol=3e-2, rtol=3e-2), "mismatch vs JAX reference"
    print("KERNEL_OK")
</pallas_src>

<mosaic_0001>
module attributes {stable_mosaic.version = 11 : i64} {
  func.func @kernel(%arg0: memref<36x64xf32, #tpu.memory_space<vmem>>, %arg1: memref<3x64x64xbf16, #tpu.memory_space<vmem>>, %arg2: memref<3x64x64xbf16, #tpu.memory_space<vmem>>, %arg3: memref<64x64xf32, #tpu.memory_space<vmem>>, %arg4: memref<1x64xf32, #tpu.memory_space<vmem>>, %arg5: memref<1x64xf32, #tpu.memory_space<vmem>>, %arg6: memref<1x64xf32, #tpu.memory_space<vmem>>, %arg7: memref<1x64xf32, #tpu.memory_space<vmem>>, %arg8: memref<32x64xf32, #tpu.memory_space<vmem>>, %arg9: memref<64x64xf32, #tpu.memory_space<vmem>>, %arg10: memref<32x64xf32, #tpu.memory_space<vmem>>) attributes {dimension_semantics = [], scalar_prefetch = 0 : i64, scratch_operands = 2 : i64, tpu.core_type = #tpu.core_type<tc>} {
    %c0 = arith.constant 0 : index
    %c0_0 = arith.constant 0 : index
    %0 = vector.load %arg0[%c0, %c0_0] : memref<36x64xf32, #tpu.memory_space<vmem>>, vector<16x64xf32>
    %1 = arith.truncf %0 : vector<16x64xf32> to vector<16x64xbf16>
    %c0_1 = arith.constant 0 : index
    %c0_2 = arith.constant 0 : index
    %c0_3 = arith.constant 0 : index
    %2 = vector.load %arg1[%c0_1, %c0_2, %c0_3] : memref<3x64x64xbf16, #tpu.memory_space<vmem>>, vector<1x64x64xbf16>
    %3 = vector.shape_cast %2 : vector<1x64x64xbf16> to vector<64x64xbf16>
    %cst = arith.constant dense<0.000000e+00> : vector<16x64xf32>
    %4 = tpu.matmul %1, %3, %cst {dimension_numbers = #tpu.dot_dimension_numbers<[1], [0], [0], [1], [0, 0, 1, 1], [], []>} : vector<16x64xbf16>, vector<64x64xbf16>, vector<16x64xf32> -> vector<16x64xf32>
    %c1 = arith.constant 1 : index
    %c0_4 = arith.constant 0 : index
    %5 = vector.load %arg0[%c1, %c0_4] : memref<36x64xf32, #tpu.memory_space<vmem>>, vector<16x64xf32>
    %6 = arith.truncf %5 : vector<16x64xf32> to vector<16x64xbf16>
    %c1_5 = arith.constant 1 : index
    %c0_6 = arith.constant 0 : index
    %c0_7 = arith.constant 0 : index
    %7 = vector.load %arg1[%c1_5, %c0_6, %c0_7] : memref<3x64x64xbf16, #tpu.memory_space<vmem>>, vector<1x64x64xbf16>
    %8 = vector.shape_cast %7 : vector<1x64x64xbf16> to vector<64x64xbf16>
    %cst_8 = arith.constant dense<0.000000e+00> : vector<16x64xf32>
    %9 = tpu.matmul %6, %8, %cst_8 {dimension_numbers = #tpu.dot_dimension_numbers<[1], [0], [0], [1], [0, 0, 1, 1], [], []>} : vector<16x64xbf16>, vector<64x64xbf16>, vector<16x64xf32> -> vector<16x64xf32>
    %10 = arith.addf %4, %9 : vector<16x64xf32>
    %c2 = arith.constant 2 : index
    %c0_9 = arith.constant 0 : index
    %11 = vector.load %arg0[%c2, %c0_9] : memref<36x64xf32, #tpu.memory_space<vmem>>, vector<16x64xf32>
    %12 = arith.truncf %11 : vector<16x64xf32> to vector<16x64xbf16>
    %c2_10 = arith.constant 2 : index
    %c0_11 = arith.constant 0 : index
    %c0_12 = arith.constant 0 : index
    %13 = vector.load %arg1[%c2_10, %c0_11, %c0_12] : memref<3x64x64xbf16, #tpu.memory_space<vmem>>, vector<1x64x64xbf16>
    %14 = vector.shape_cast %13 : vector<1x64x64xbf16> to vector<64x64xbf16>
    %cst_13 = arith.constant dense<0.000000e+00> : vector<16x64xf32>
    %15 = tpu.matmul %12, %14, %cst_13 {dimension_numbers = #tpu.dot_dimension_numbers<[1], [0], [0], [1], [0, 0, 1, 1], [], []>} : vector<16x64xbf16>, vector<64x64xbf16>, vector<16x64xf32> -> vector<16x64xf32>
    %16 = arith.addf %10, %15 : vector<16x64xf32>
    %c0_14 = arith.constant 0 : index
    %c0_15 = arith.constant 0 : index
    %17 = vector.load %arg10[%c0_14, %c0_15] : memref<32x64xf32, #tpu.memory_space<vmem>>, vector<16x64xf32>
    tpu.vector_store %arg10[%c0_14, %c0_15], %16 {strides = array<i32>} : memref<32x64xf32, #tpu.memory_space<vmem>>, vector<16x64xf32>,
    %c18 = arith.constant 18 : index
    %c0_16 = arith.constant 0 : index
    %18 = vector.load %arg0[%c18, %c0_16] : memref<36x64xf32, #tpu.memory_space<vmem>>, vector<16x64xf32>
    %19 = arith.truncf %18 : vector<16x64xf32> to vector<16x64xbf16>
    %c0_17 = arith.constant 0 : index
    %c0_18 = arith.constant 0 : index
    %c0_19 = arith.constant 0 : index
    %20 = vector.load %arg1[%c0_17, %c0_18, %c0_19] : memref<3x64x64xbf16, #tpu.memory_space<vmem>>, vector<1x64x64xbf16>
    %21 = vector.shape_cast %20 : vector<1x64x64xbf16> to vector<64x64xbf16>
    %cst_20 = arith.constant dense<0.000000e+00> : vector<16x64xf32>
    %22 = tpu.matmul %19, %21, %cst_20 {dimension_numbers = #tpu.dot_dimension_numbers<[1], [0], [0], [1], [0, 0, 1, 1], [], []>} : vector<16x64xbf16>, vector<64x64xbf16>, vector<16x64xf32> -> vector<16x64xf32>
    %c19 = arith.constant 19 : index
    %c0_21 = arith.constant 0 : index
    %23 = vector.load %arg0[%c19, %c0_21] : memref<36x64xf32, #tpu.memory_space<vmem>>, vector<16x64xf32>
    %24 = arith.truncf %23 : vector<16x64xf32> to vector<16x64xbf16>
    %c1_22 = arith.constant 1 : index
    %c0_23 = arith.constant 0 : index
    %c0_24 = arith.constant 0 : index
    %25 = vector.load %arg1[%c1_22, %c0_23, %c0_24] : memref<3x64x64xbf16, #tpu.memory_space<vmem>>, vector<1x64x64xbf16>
    %26 = vector.shape_cast %25 : vector<1x64x64xbf16> to vector<64x64xbf16>
    %cst_25 = arith.constant dense<0.000000e+00> : vector<16x64xf32>
    %27 = tpu.matmul %24, %26, %cst_25 {dimension_numbers = #tpu.dot_dimension_numbers<[1], [0], [0], [1], [0, 0, 1, 1], [], []>} : vector<16x64xbf16>, vector<64x64xbf16>, vector<16x64xf32> -> vector<16x64xf32>
    %28 = arith.addf %22, %27 : vector<16x64xf32>
    %c20 = arith.constant 20 : index
    %c0_26 = arith.constant 0 : index
    %29 = vector.load %arg0[%c20, %c0_26] : memref<36x64xf32, #tpu.memory_space<vmem>>, vector<16x64xf32>
    %30 = arith.truncf %29 : vector<16x64xf32> to vector<16x64xbf16>
    %c2_27 = arith.constant 2 : index
    %c0_28 = arith.constant 0 : index
    %c0_29 = arith.constant 0 : index
    %31 = vector.load %arg1[%c2_27, %c0_28, %c0_29] : memref<3x64x64xbf16, #tpu.memory_space<vmem>>, vector<1x64x64xbf16>
    %32 = vector.shape_cast %31 : vector<1x64x64xbf16> to vector<64x64xbf16>
    %cst_30 = arith.constant dense<0.000000e+00> : vector<16x64xf32>
    %33 = tpu.matmul %30, %32, %cst_30 {dimension_numbers = #tpu.dot_dimension_numbers<[1], [0], [0], [1], [0, 0, 1, 1], [], []>} : vector<16x64xbf16>, vector<64x64xbf16>, vector<16x64xf32> -> vector<16x64xf32>
    %34 = arith.addf %28, %33 : vector<16x64xf32>
    %c16 = arith.constant 16 : index
    %c0_31 = arith.constant 0 : index
    %35 = vector.load %arg10[%c16, %c0_31] : memref<32x64xf32, #tpu.memory_space<vmem>>, vector<16x64xf32>
    tpu.vector_store %arg10[%c16, %c0_31], %34 {strides = array<i32>} : memref<32x64xf32, #tpu.memory_space<vmem>>, vector<16x64xf32>,
    %c0_32 = arith.constant 0 : index
    %c0_33 = arith.constant 0 : index
    %36 = vector.load %arg10[%c0_32, %c0_33] : memref<32x64xf32, #tpu.memory_space<vmem>>, vector<32x64xf32>
    %c0_34 = arith.constant 0 : index
    %c0_35 = arith.constant 0 : index
    %37 = vector.load %arg3[%c0_34, %c0_35] : memref<64x64xf32, #tpu.memory_space<vmem>>, vector<64x64xf32>
    %cst_36 = arith.constant dense<0.000000e+00> : vector<64xf32>
    %38 = vector.multi_reduction <add>, %36, %cst_36 [0] : vector<32x64xf32> to vector<64xf32>
    %39 = vector.shape_cast %38 : vector<64xf32> to vector<1x64xf32>
    %cst_37 = arith.constant dense<0.000000e+00> : vector<1x64xf32>
    %40 = tpu.matmul %39, %37, %cst_37 {dimension_numbers = #tpu.dot_dimension_numbers<[1], [0], [0], [1], [0, 0, 1, 1], [], []>} : vector<1x64xf32>, vector<64x64xf32>, vector<1x64xf32> -> vector<1x64xf32>
    %cst_38 = arith.constant 0.001953125 : f32
    %41 = vector.broadcast %cst_38 : f32 to vector<1x64xf32>
    %42 = arith.mulf %40, %41 : vector<1x64xf32>
    %43 = vector.broadcast %42 : vector<1x64xf32> to vector<32x64xf32>
    %44 = arith.subf %36, %43 : vector<32x64xf32>
    %45 = arith.mulf %44, %44 : vector<32x64xf32>
    %cst_39 = arith.constant dense<0.000000e+00> : vector<64xf32>
    %46 = vector.multi_reduction <add>, %45, %cst_39 [0] : vector<32x64xf32> to vector<64xf32>
    %47 = vector.shape_cast %46 : vector<64xf32> to vector<1x64xf32>
    %cst_40 = arith.constant dense<0.000000e+00> : vector<1x64xf32>
    %48 = tpu.matmul %47, %37, %cst_40 {dimension_numbers = #tpu.dot_dimension_numbers<[1], [0], [0], [1], [0, 0, 1, 1], [], []>} : vector<1x64xf32>, vector<64x64xf32>, vector<1x64xf32> -> vector<1x64xf32>
    %cst_41 = arith.constant 0.001953125 : f32
    %49 = vector.broadcast %cst_41 : f32 to vector<1x64xf32>
    %50 = arith.mulf %48, %49 : vector<1x64xf32>
    %c0_42 = arith.constant 0 : index
    %c0_43 = arith.constant 0 : index
    %51 = vector.load %arg4[%c0_42, %c0_43] : memref<1x64xf32, #tpu.memory_space<vmem>>, vector<1x64xf32>
    %cst_44 = arith.constant 9.99999974E-6 : f32
    %52 = vector.broadcast %cst_44 : f32 to vector<1x64xf32>
    %53 = arith.addf %50, %52 : vector<1x64xf32>
    %54 = math.rsqrt %53 : vector<1x64xf32>
    %55 = arith.mulf %51, %54 : vector<1x64xf32>
    %c0_45 = arith.constant 0 : index
    %c0_46 = arith.constant 0 : index
    %56 = vector.load %arg5[%c0_45, %c0_46] : memref<1x64xf32, #tpu.memory_space<vmem>>, vector<1x64xf32>
    %57 = arith.mulf %42, %55 : vector<1x64xf32>
    %58 = arith.subf %56, %57 : vector<1x64xf32>
    %59 = vector.broadcast %55 : vector<1x64xf32> to vector<32x64xf32>
    %60 = arith.mulf %36, %59 : vector<32x64xf32>
    %61 = vector.broadcast %58 : vector<1x64xf32> to vector<32x64xf32>
    %62 = arith.addf %60, %61 : vector<32x64xf32>
    %cst_47 = arith.constant 0.000000e+00 : f32
    %63 = vector.broadcast %cst_47 : f32 to vector<32x64xf32>
    %64 = arith.maximumf %62, %63 : vector<32x64xf32>
    %cst_48 = arith.constant 0.000000e+00 : f32
    %65 = vector.broadcast %cst_48 : f32 to vector<64x64xf32>
    %c0_49 = arith.constant 0 : index
    %c0_50 = arith.constant 0 : index
    %66 = vector.load %arg9[%c0_49, %c0_50] : memref<64x64xf32, #tpu.memory_space<vmem>>, vector<64x64xf32>
    tpu.vector_store %arg9[%c0_49, %c0_50], %65 {strides = array<i32>} : memref<64x64xf32, #tpu.memory_space<vmem>>, vector<64x64xf32>,
    %67 = vector.extract_strided_slice %64 {offsets = [0, 0], sizes = [16, 64], strides = [1, 1]} : vector<32x64xf32> to vector<16x64xf32>
    %c8 = arith.constant 8 : index
    %c0_51 = arith.constant 0 : index
    %68 = vector.load %arg9[%c8, %c0_51] : memref<64x64xf32, #tpu.memory_space<vmem>>, vector<16x64xf32>
    tpu.vector_store %arg9[%c8, %c0_51], %67 {strides = array<i32>} : memref<64x64xf32, #tpu.memory_space<vmem>>, vector<16x64xf32>,
    %69 = vector.extract_strided_slice %64 {offsets = [16, 0], sizes = [16, 64], strides = [1, 1]} : vector<32x64xf32> to vector<16x64xf32>
    %c40 = arith.constant 40 : index
    %c0_52 = arith.constant 0 : index
    %70 = vector.load %arg9[%c40, %c0_52] : memref<64x64xf32, #tpu.memory_space<vmem>>, vector<16x64xf32>
    tpu.vector_store %arg9[%c40, %c0_52], %69 {strides = array<i32>} : memref<64x64xf32, #tpu.memory_space<vmem>>, vector<16x64xf32>,
    %c7 = arith.constant 7 : index
    %c0_53 = arith.constant 0 : index
    %71 = vector.load %arg9[%c7, %c0_53] : memref<64x64xf32, #tpu.memory_space<vmem>>, vector<16x64xf32>
    %72 = arith.truncf %71 : vector<16x64xf32> to vector<16x64xbf16>
    %c0_54 = arith.constant 0 : index
    %c0_55 = arith.constant 0 : index
    %c0_56 = arith.constant 0 : index
    %73 = vector.load %arg2[%c0_54, %c0_55, %c0_56] : memref<3x64x64xbf16, #tpu.memory_space<vmem>>, vector<1x64x64xbf16>
    %74 = vector.shape_cast %73 : vector<1x64x64xbf16> to vector<64x64xbf16>
    %cst_57 = arith.constant dense<0.000000e+00> : vector<16x64xf32>
    %75 = tpu.matmul %72, %74, %cst_57 {dimension_numbers = #tpu.dot_dimension_numbers<[1], [0], [0], [1], [0, 0, 1, 1], [], []>} : vector<16x64xbf16>, vector<64x64xbf16>, vector<16x64xf32> -> vector<16x64xf32>
    %c8_58 = arith.constant 8 : index
    %c0_59 = arith.constant 0 : index
    %76 = vector.load %arg9[%c8_58, %c0_59] : memref<64x64xf32, #tpu.memory_space<vmem>>, vector<16x64xf32>
    %77 = arith.truncf %76 : vector<16x64xf32> to vector<16x64xbf16>
    %c1_60 = arith.constant 1 : index
    %c0_61 = arith.constant 0 : index
    %c0_62 = arith.constant 0 : index
    %78 = vector.load %arg2[%c1_60, %c0_61, %c0_62] : memref<3x64x64xbf16, #tpu.memory_space<vmem>>, vector<1x64x64xbf16>
    %79 = vector.shape_cast %78 : vector<1x64x64xbf16> to vector<64x64xbf16>
    %cst_63 = arith.constant dense<0.000000e+00> : vector<16x64xf32>
    %80 = tpu.matmul %77, %79, %cst_63 {dimension_numbers = #tpu.dot_dimension_numbers<[1], [0], [0], [1], [0, 0, 1, 1], [], []>} : vector<16x64xbf16>, vector<64x64xbf16>, vector<16x64xf32> -> vector<16x64xf32>
    %81 = arith.addf %75, %80 : vector<16x64xf32>
    %c9 = arith.constant 9 : index
    %c0_64 = arith.constant 0 : index
    %82 = vector.load %arg9[%c9, %c0_64] : memref<64x64xf32, #tpu.memory_space<vmem>>, vector<16x64xf32>
    %83 = arith.truncf %82 : vector<16x64xf32> to vector<16x64xbf16>
    %c2_65 = arith.constant 2 : index
    %c0_66 = arith.constant 0 : index
    %c0_67 = arith.constant 0 : index
    %84 = vector.load %arg2[%c2_65, %c0_66, %c0_67] : memref<3x64x64xbf16, #tpu.memory_space<vmem>>, vector<1x64x64xbf16>
    %85 = vector.shape_cast %84 : vector<1x64x64xbf16> to vector<64x64xbf16>
    %cst_68 = arith.constant dense<0.000000e+00> : vector<16x64xf32>
    %86 = tpu.matmul %83, %85, %cst_68 {dimension_numbers = #tpu.dot_dimension_numbers<[1], [0], [0], [1], [0, 0, 1, 1], [], []>} : vector<16x64xbf16>, vector<64x64xbf16>, vector<16x64xf32> -> vector<16x64xf32>
    %87 = arith.addf %81, %86 : vector<16x64xf32>
    %c0_69 = arith.constant 0 : index
    %c0_70 = arith.constant 0 : index
    %88 = vector.load %arg10[%c0_69, %c0_70] : memref<32x64xf32, #tpu.memory_space<vmem>>, vector<16x64xf32>
    tpu.vector_store %arg10[%c0_69, %c0_70], %87 {strides = array<i32>} : memref<32x64xf32, #tpu.memory_space<vmem>>, vector<16x64xf32>,
    %c39 = arith.constant 39 : index
    %c0_71 = arith.constant 0 : index
    %89 = vector.load %arg9[%c39, %c0_71] : memref<64x64xf32, #tpu.memory_space<vmem>>, vector<16x64xf32>
    %90 = arith.truncf %89 : vector<16x64xf32> to vector<16x64xbf16>
    %c0_72 = arith.constant 0 : index
    %c0_73 = arith.constant 0 : index
    %c0_74 = arith.constant 0 : index
    %91 = vector.load %arg2[%c0_72, %c0_73, %c0_74] : memref<3x64x64xbf16, #tpu.memory_space<vmem>>, vector<1x64x64xbf16>
    %92 = vector.shape_cast %91 : vector<1x64x64xbf16> to vector<64x64xbf16>
    %cst_75 = arith.constant dense<0.000000e+00> : vector<16x64xf32>
    %93 = tpu.matmul %90, %92, %cst_75 {dimension_numbers = #tpu.dot_dimension_numbers<[1], [0], [0], [1], [0, 0, 1, 1], [], []>} : vector<16x64xbf16>, vector<64x64xbf16>, vector<16x64xf32> -> vector<16x64xf32>
    %c40_76 = arith.constant 40 : index
    %c0_77 = arith.constant 0 : index
    %94 = vector.load %arg9[%c40_76, %c0_77] : memref<64x64xf32, #tpu.memory_space<vmem>>, vector<16x64xf32>
    %95 = arith.truncf %94 : vector<16x64xf32> to vector<16x64xbf16>
    %c1_78 = arith.constant 1 : index
    %c0_79 = arith.constant 0 : index
    %c0_80 = arith.constant 0 : index
    %96 = vector.load %arg2[%c1_78, %c0_79, %c0_80] : memref<3x64x64xbf16, #tpu.memory_space<vmem>>, vector<1x64x64xbf16>
    %97 = vector.shape_cast %96 : vector<1x64x64xbf16> to vector<64x64xbf16>
    %cst_81 = arith.constant dense<0.000000e+00> : vector<16x64xf32>
    %98 = tpu.matmul %95, %97, %cst_81 {dimension_numbers = #tpu.dot_dimension_numbers<[1], [0], [0], [1], [0, 0, 1, 1], [], []>} : vector<16x64xbf16>, vector<64x64xbf16>, vector<16x64xf32> -> vector<16x64xf32>
    %99 = arith.addf %93, %98 : vector<16x64xf32>
    %c41 = arith.constant 41 : index
    %c0_82 = arith.constant 0 : index
    %100 = vector.load %arg9[%c41, %c0_82] : memref<64x64xf32, #tpu.memory_space<vmem>>, vector<16x64xf32>
    %101 = arith.truncf %100 : vector<16x64xf32> to vector<16x64xbf16>
    %c2_83 = arith.constant 2 : index
    %c0_84 = arith.constant 0 : index
    %c0_85 = arith.constant 0 : index
    %102 = vector.load %arg2[%c2_83, %c0_84, %c0_85] : memref<3x64x64xbf16, #tpu.memory_space<vmem>>, vector<1x64x64xbf16>
    %103 = vector.shape_cast %102 : vector<1x64x64xbf16> to vector<64x64xbf16>
    %cst_86 = arith.constant dense<0.000000e+00> : vector<16x64xf32>
    %104 = tpu.matmul %101, %103, %cst_86 {dimension_numbers = #tpu.dot_dimension_numbers<[1], [0], [0], [1], [0, 0, 1, 1], [], []>} : vector<16x64xbf16>, vector<64x64xbf16>, vector<16x64xf32> -> vector<16x64xf32>
    %105 = arith.addf %99, %104 : vector<16x64xf32>
    %c16_87 = arith.constant 16 : index
    %c0_88 = arith.constant 0 : index
    %106 = vector.load %arg10[%c16_87, %c0_88] : memref<32x64xf32, #tpu.memory_space<vmem>>, vector<16x64xf32>
    tpu.vector_store %arg10[%c16_87, %c0_88], %105 {strides = array<i32>} : memref<32x64xf32, #tpu.memory_space<vmem>>, vector<16x64xf32>,
    %c0_89 = arith.constant 0 : index
    %c0_90 = arith.constant 0 : index
    %107 = vector.load %arg10[%c0_89, %c0_90] : memref<32x64xf32, #tpu.memory_space<vmem>>, vector<32x64xf32>
    %c0_91 = arith.constant 0 : index
    %c0_92 = arith.constant 0 : index
    %108 = vector.load %arg3[%c0_91, %c0_92] : memref<64x64xf32, #tpu.memory_space<vmem>>, vector<64x64xf32>
    %cst_93 = arith.constant dense<0.000000e+00> : vector<64xf32>
    %109 = vector.multi_reduction <add>, %107, %cst_93 [0] : vector<32x64xf32> to vector<64xf32>
    %110 = vector.shape_cast %109 : vector<64xf32> to vector<1x64xf32>
    %cst_94 = arith.constant dense<0.000000e+00> : vector<1x64xf32>
    %111 = tpu.matmul %110, %108, %cst_94 {dimension_numbers = #tpu.dot_dimension_numbers<[1], [0], [0], [1], [0, 0, 1, 1], [], []>} : vector<1x64xf32>, vector<64x64xf32>, vector<1x64xf32> -> vector<1x64xf32>
    %cst_95 = arith.constant 0.001953125 : f32
    %112 = vector.broadcast %cst_95 : f32 to vector<1x64xf32>
    %113 = arith.mulf %111, %112 : vector<1x64xf32>
    %114 = vector.broadcast %113 : vector<1x64xf32> to vector<32x64xf32>
    %115 = arith.subf %107, %114 : vector<32x64xf32>
    %116 = arith.mulf %115, %115 : vector<32x64xf32>
    %cst_96 = arith.constant dense<0.000000e+00> : vector<64xf32>
    %117 = vector.multi_reduction <add>, %116, %cst_96 [0] : vector<32x64xf32> to vector<64xf32>
    %118 = vector.shape_cast %117 : vector<64xf32> to vector<1x64xf32>
    %cst_97 = arith.constant dense<0.000000e+00> : vector<1x64xf32>
    %119 = tpu.matmul %118, %108, %cst_97 {dimension_numbers = #tpu.dot_dimension_numbers<[1], [0], [0], [1], [0, 0, 1, 1], [], []>} : vector<1x64xf32>, vector<64x64xf32>, vector<1x64xf32> -> vector<1x64xf32>
    %cst_98 = arith.constant 0.001953125 : f32
    %120 = vector.broadcast %cst_98 : f32 to vector<1x64xf32>
    %121 = arith.mulf %119, %120 : vector<1x64xf32>
    %c0_99 = arith.constant 0 : index
    %c0_100 = arith.constant 0 : index
    %122 = vector.load %arg6[%c0_99, %c0_100] : memref<1x64xf32, #tpu.memory_space<vmem>>, vector<1x64xf32>
    %cst_101 = arith.constant 9.99999974E-6 : f32
    %123 = vector.broadcast %cst_101 : f32 to vector<1x64xf32>
    %124 = arith.addf %121, %123 : vector<1x64xf32>
    %125 = math.rsqrt %124 : vector<1x64xf32>
    %126 = arith.mulf %122, %125 : vector<1x64xf32>
    %c0_102 = arith.constant 0 : index
    %c0_103 = arith.constant 0 : index
    %127 = vector.load %arg7[%c0_102, %c0_103] : memref<1x64xf32, #tpu.memory_space<vmem>>, vector<1x64xf32>
    %128 = arith.mulf %113, %126 : vector<1x64xf32>
    %129 = arith.subf %127, %128 : vector<1x64xf32>
    %130 = vector.broadcast %126 : vector<1x64xf32> to vector<32x64xf32>
    %131 = arith.mulf %107, %130 : vector<32x64xf32>
    %132 = vector.broadcast %129 : vector<1x64xf32> to vector<32x64xf32>
    %133 = arith.addf %131, %132 : vector<32x64xf32>
    %c1_104 = arith.constant 1 : index
    %c0_105 = arith.constant 0 : index
    %134 = vector.load %arg0[%c1_104, %c0_105] : memref<36x64xf32, #tpu.memory_space<vmem>>, vector<16x64xf32>
    %135 = vector.extract_strided_slice %133 {offsets = [0, 0], sizes = [16, 64], strides = [1, 1]} : vector<32x64xf32> to vector<16x64xf32>
    %136 = arith.addf %134, %135 : vector<16x64xf32>
    %c0_106 = arith.constant 0 : index
    %c0_107 = arith.constant 0 : index
    %137 = vector.load %arg8[%c0_106, %c0_107] : memref<32x64xf32, #tpu.memory_space<vmem>>, vector<16x64xf32>
    tpu.vector_store %arg8[%c0_106, %c0_107], %136 {strides = array<i32>} : memref<32x64xf32, #tpu.memory_space<vmem>>, vector<16x64xf32>,
    %c19_108 = arith.constant 19 : index
    %c0_109 = arith.constant 0 : index
    %138 = vector.load %arg0[%c19_108, %c0_109] : memref<36x64xf32, #tpu.memory_space<vmem>>, vector<16x64xf32>
    %139 = vector.extract_strided_slice %133 {offsets = [16, 0], sizes = [16, 64], strides = [1, 1]} : vector<32x64xf32> to vector<16x64xf32>
    %140 = arith.addf %138, %139 : vector<16x64xf32>
    %c16_110 = arith.constant 16 : index
    %c0_111 = arith.constant 0 : index
    %141 = vector.load %arg8[%c16_110, %c0_111] : memref<32x64xf32, #tpu.memory_space<vmem>>, vector<16x64xf32>
    tpu.vector_store %arg8[%c16_110, %c0_111], %140 {strides = array<i32>} : memref<32x64xf32, #tpu.memory_space<vmem>>, vector<16x64xf32>,
    return
  }
}

</mosaic_0001>

<llo_original>
// kernel: tpu_custom_call.1
$region0: #{tpu_custom_call.1}
  #allocation0 [shape = 'u32[]', space=smem, size = 0x4, offset = 0x4, fixed_abs, tag = 'smem constant byte address 0x4 - core index']
  #allocation1 [shape = 'u32[144,128]{1,0:T(1,128)}', space=vmem, size = 0x12000, scoped, tag = 'internal scratch']
  #allocation2 [shape = 'f32[64,64]{1,0:T(8,128)}', space=vmem, size = 0x8000, scoped, tag = 'scratch operand']
  #allocation3 [shape = 'f32[32,64]{1,0:T(8,128)}', space=vmem, size = 0x4000, scoped, tag = 'scratch operand']
  %s0 = inlined_call_operand.hbm [shape: f32[36,64], index: 0, kind: input, shape index: {}]
  %s1 = inlined_call_operand.hbm [shape: bf16[3,64,64], index: 1, kind: input, shape index: {}]
  %s2 = inlined_call_operand.hbm [shape: bf16[3,64,64], index: 2, kind: input, shape index: {}]
  %s3 = inlined_call_operand.hbm [shape: f32[64,64], index: 3, kind: input, shape index: {}]
  %s4 = inlined_call_operand.vmem [shape: f32[1,64], index: 4, kind: input, shape index: {}]
  %s5 = inlined_call_operand.vmem [shape: f32[1,64], index: 5, kind: input, shape index: {}]
  %s6 = inlined_call_operand.vmem [shape: f32[1,64], index: 6, kind: input, shape index: {}]
  %s7 = inlined_call_operand.vmem [shape: f32[1,64], index: 7, kind: input, shape index: {}]
  %s8 = inlined_call_operand.hbm [shape: f32[32,64], index: 8, kind: output, shape index: {}]
  %s9 = sld [smem:[#allocation0]]
  $region58: #{tpu_custom_call.1} parent=0
    _
  %s11 = ssub.s32 1, %s9
  %s12 = scalar_select 0, %s11, %s9
  $region1: #{tpu_custom_call.1} parent=0
    #allocation4 [shape = 'u8[20480]{0}', space=vmem, size = 0x5000, scoped, tag = 'input window, operand 0, single buffered']
    #allocation5 [shape = 's32[1]{0}', space=sflag, size = 0x4, scoped, tag = 'scoped memory for tpu_custom_call.1']
    #allocation6 [shape = 's32[1]{0}', space=sflag, size = 0x4, scoped, tag = 'scoped memory for tpu_custom_call.1']
    #allocation7 [shape = 'u8[49152]{0}', space=vmem, size = 0xc000, scoped, tag = 'input window, operand 1, single buffered']
    #allocation8 [shape = 's32[1]{0}', space=sflag, size = 0x4, scoped, tag = 'scoped memory for tpu_custom_call.1']
    #allocation9 [shape = 'u8[49152]{0}', space=vmem, size = 0xc000, scoped, tag = 'input window, operand 2, single buffered']
    #allocation10 [shape = 'u8[32768]{0}', space=vmem, size = 0x8000, scoped, tag = 'input window, operand 3, single buffered']
    #allocation11 [shape = 's32[1]{0}', space=sflag, size = 0x4, scoped, tag = 'scoped memory for tpu_custom_call.1']
    #allocation12 [shape = 'u8[16384]{0}', space=vmem, size = 0x4000, scoped, tag = 'output window, operand 0, single buffered']
    %13 = vsyncpa [#allocation5], 0
    %14 = vsyncpa [#allocation8], 0
    %15 = vsyncpa [#allocation11], 0
    %16 = vsyncpa [#allocation6], 0
    // Predicated region
    $region2: #{tpu_custom_call.1} parent=1 // pred_check
      _
    $region3: #{tpu_custom_call.1} parent=1 // pred_check_branch
      %18 = sbr.rel (0) target = $region5
    $region4: #{tpu_custom_call.1} parent=1 // pred_region
      %s20 = ssub.s32 640, 640
      %21 = vsyncadd [#allocation5], %s20
      %s22 = sshll.u32 [#allocation4], 4
      %s23 = int_to_ptr.vmem [resolvable:$true] %s22
      %28 = dma.hbm_to_vmem [thread:$0]  %s0, 640, %s23, [#allocation5], 128, 128, 8
    $region5: #{tpu_custom_call.1} parent=1 // pred_fallthru
      _
    // Predicated region
    $region6: #{tpu_custom_call.1} parent=1 // pred_check
      _
    $region7: #{tpu_custom_call.1} parent=1 // pred_check_branch
      %30 = sbr.rel (0) target = $region9
    $region8: #{tpu_custom_call.1} parent=1 // pred_region
      %s32 = ssub.s32 1536, 1536
      %33 = vsyncadd [#allocation8], %s32
      %s34 = sshll.u32 [#allocation7], 4
      %s35 = int_to_ptr.vmem [resolvable:$true] %s34
      %40 = dma.hbm_to_vmem [thread:$0]  %s1, 1536, %s35, [#allocation8], 64, 64, 4
    $region9: #{tpu_custom_call.1} parent=1 // pred_fallthru
      _
    // Predicated region
    $region10: #{tpu_custom_call.1} parent=1 // pred_check
      _
    $region11: #{tpu_custom_call.1} parent=1 // pred_check_branch
      %42 = sbr.rel (0) target = $region13
    $region12: #{tpu_custom_call.1} parent=1 // pred_region
      %s44 = ssub.s32 1536, 1536
      %45 = vsyncadd [#allocation8], %s44
      %s46 = sshll.u32 [#allocation9], 4
      %s47 = int_to_ptr.vmem [resolvable:$true] %s46
      %52 = dma.hbm_to_vmem [thread:$0]  %s2, 1536, %s47, [#allocation8], 64, 64, 4
    $region13: #{tpu_custom_call.1} parent=1 // pred_fallthru
      _
    // Predicated region
    $region14: #{tpu_custom_call.1} parent=1 // pred_check
      _
    $region15: #{tpu_custom_call.1} parent=1 // pred_check_branch
      %54 = sbr.rel (0) target = $region17
    $region16: #{tpu_custom_call.1} parent=1 // pred_region
      %s56 = ssub.s32 1024, 1024
      %57 = vsyncadd [#allocation11], %s56
      %s58 = sshll.u32 [#allocation10], 4
      %s59 = int_to_ptr.vmem [resolvable:$true] %s58
      %64 = dma.hbm_to_vmem [thread:$0]  %s3, 1024, %s59, [#allocation11], 128, 128, 8
    $region17: #{tpu_custom_call.1} parent=1 // pred_fallthru
      _
    // Predicated region
    $region18: #{tpu_custom_call.1} parent=1 // pred_check
      _
    $region19: #{tpu_custom_call.1} parent=1 // pred_check_branch
      %66 = sbr.rel (0) target = $region21
    $region20: #{tpu_custom_call.1} parent=1 // pred_region
      _
    $region21: #{tpu_custom_call.1} parent=1 // pred_fallthru
      _
    // Predicated region
    $region22: #{tpu_custom_call.1} parent=1 // pred_check
      _
    $region23: #{tpu_custom_call.1} parent=1 // pred_check_branch
      %68 = sbr.rel (0) target = $region25
    $region24: #{tpu_custom_call.1} parent=1 // pred_region
      _
    $region25: #{tpu_custom_call.1} parent=1 // pred_fallthru
      _
    // Predicated region
    $region26: #{tpu_custom_call.1} parent=1 // pred_check
      _
    $region27: #{tpu_custom_call.1} parent=1 // pred_check_branch
      %70 = sbr.rel (0) target = $region29
    $region28: #{tpu_custom_call.1} parent=1 // pred_region
      _
    $region29: #{tpu_custom_call.1} parent=1 // pred_fallthru
      _
    // Predicated region
    $region30: #{tpu_custom_call.1} parent=1 // pred_check
      _
    $region31: #{tpu_custom_call.1} parent=1 // pred_check_branch
      %72 = sbr.rel (0) target = $region33
    $region32: #{tpu_custom_call.1} parent=1 // pred_region
      _
    $region33: #{tpu_custom_call.1} parent=1 // pred_fallthru
      _
    // Predicated region
    $region34: #{tpu_custom_call.1} parent=1 // pred_check
      _
    $region35: #{tpu_custom_call.1} parent=1 // pred_check_branch
      %74 = sbr.rel (0) target = $region37
    $region36: #{tpu_custom_call.1} parent=1 // pred_region
      %75 = dma.done [#allocation5], 640
    $region37: #{tpu_custom_call.1} parent=1 // pred_fallthru
      _
    // Predicated region
    $region38: #{tpu_custom_call.1} parent=1 // pred_check
      _
    $region39: #{tpu_custom_call.1} parent=1 // pred_check_branch
      %77 = sbr.rel (0) target = $region41
    $region40: #{tpu_custom_call.1} parent=1 // pred_region
      %78 = dma.done [#allocation8], 1536
    $region41: #{tpu_custom_call.1} parent=1 // pred_fallthru
      _
    // Predicated region
    $region42: #{tpu_custom_call.1} parent=1 // pred_check
      _
    $region43: #{tpu_custom_call.1} parent=1 // pred_check_branch
      %80 = sbr.rel (0) target = $region45
    $region44: #{tpu_custom_call.1} parent=1 // pred_region
      %81 = dma.done [#allocation8], 1536
    $region45: #{tpu_custom_call.1} parent=1 // pred_fallthru
      _
    // Predicated region
    $region46: #{tpu_custom_call.1} parent=1 // pred_check
      _
    $region47: #{tpu_custom_call.1} parent=1 // pred_check_branch
      %83 = sbr.rel (0) target = $region49
    $region48: #{tpu_custom_call.1} parent=1 // pred_region
      %84 = dma.done [#allocation11], 1024
    $region49: #{tpu_custom_call.1} parent=1 // pred_fallthru
      _
    %v86 = vld [vmem:[#allocation4] sm:$0xff]
    %v87 = vld [vmem:[#allocation4 + $0x8] sm:$0xff]
    %v88 = vpack.c.bf16 %v87, %v86
    %v89 = vld [vmem:[#allocation7] sm:$0xf]
    %v90 = vld [vmem:[#allocation7 + $0x4] sm:$0xf]
    %v91 = vld [vmem:[#allocation7 + $0x8] sm:$0xf]
    %v92 = vld [vmem:[#allocation7 + $0xc] sm:$0xf]
    %v93 = vld [vmem:[#allocation7 + $0x10] sm:$0xf]
    %v94 = vld [vmem:[#allocation7 + $0x14] sm:$0xf]
    %v95 = vld [vmem:[#allocation7 + $0x18] sm:$0xf]
    %v96 = vld [vmem:[#allocation7 + $0x1c] sm:$0xf]
    %v97 = vld [vmem:[#allocation4 + $0x1] sm:$0xff]
    %v98 = vld [vmem:[#allocation4 + $0x9] sm:$0xff]
    %v99 = vpack.c.bf16 %v98, %v97
    %s100 = scalar_lea.vmem [#allocation7], 32
    %v101 = vld [vmem:[%s100] sm:$0xf]
    %v102 = vld [vmem:[%s100 + $0x4] sm:$0xf]
    %v103 = vld [vmem:[%s100 + $0x8] sm:$0xf]
    %v104 = vld [vmem:[%s100 + $0xc] sm:$0xf]
    %v105 = vld [vmem:[%s100 + $0x10] sm:$0xf]
    %v106 = vld [vmem:[%s100 + $0x14] sm:$0xf]
    %v107 = vld [vmem:[%s100 + $0x18] sm:$0xf]
    %v108 = vld [vmem:[%s100 + $0x1c] sm:$0xf]
    %v117 = vunpack.c.l.b16 %v101
    %v118 = vunpack.c.l.b16 %v102
    %v119 = vunpack.c.l.b16 %v103
    %v120 = vunpack.c.l.b16 %v104
    %v121 = vunpack.c.l.b16 %v105
    %v122 = vunpack.c.l.b16 %v106
    %v123 = vunpack.c.l.b16 %v107
    %v124 = vunpack.c.l.b16 %v108
    %v125 = vpack.c.b16 %v118, %v117
    %v126 = vpack.c.b16 %v120, %v119
    %v127 = vpack.c.b16 %v122, %v121
    %v128 = vpack.c.b16 %v124, %v123
    %vm133 = vcmask 523264
    %v135 = vsel %vm133, %v99, 0
    %137 = vmatprep.subr.bf16.mxu0 0
    %138 = vmatpush1.bf16.msra.mxu0 %v125
    %139 = vmatprep.subr.bf16.mxu0 0
    %140 = vmatpush1.bf16.msra.mxu0 %v126
    %141 = vmatprep.subr.bf16.mxu0 0
    %142 = vmatpush1.bf16.msra.mxu0 %v127
    %143 = vmatprep.subr.bf16.mxu0 0
    %144 = vmatpush1.bf16.msra.mxu0 %v128
    %145 = vmatprep.subr.bf16.mxu0 0
    %146 = vmatpush1.bf16.msra.mxu0 0
    %147 = vmatprep.subr.bf16.mxu0 0
    %148 = vmatpush1.bf16.msra.mxu0 0
    %149 = vmatprep.subr.bf16.mxu0 0
    %150 = vmatpush1.bf16.msra.mxu0 0
    %151 = vmatprep.subr.bf16.mxu0 0
    %152 = vmatpush1.bf16.msra.mxu0 0
    %153 = vmatprep.subr.bf16.mxu0 0
    %154 = vmatpush1.bf16.msra.mxu0 0
    %155 = vmatprep.subr.bf16.mxu0 0
    %156 = vmatpush1.bf16.msra.mxu0 0
    %157 = vmatprep.subr.bf16.mxu0 0
    %158 = vmatpush1.bf16.msra.mxu0 0
    %159 = vmatprep.subr.bf16.mxu0 0
    %160 = vmatpush1.bf16.msra.mxu0 0
    %161 = vmatprep.subr.bf16.mxu0 0
    %162 = vmatpush1.bf16.msra.mxu0 0
    %163 = vmatprep.subr.bf16.mxu0 0
    %164 = vmatpush1.bf16.msra.mxu0 0
    %165 = vmatprep.subr.bf16.mxu0 0
    %166 = vmatpush1.bf16.msra.mxu0 0
    %167 = vmatprep.subr.bf16.mxu0 0
    %168 = vmatpush1.bf16.msra.mxu0 0
    %169 = vmatprep.mubr.bf16.mxu0 0
    %170 = vmatmul.mubr.bf16.gmra.mrb[0].mxu0 %v135
    %v171 = vpop.f32.mrb[0].mxu0
    %v172 = vadd.f32 0.0, %v171
    %v173 = vpop.f32.mrb[0].mxu0
    %v174 = vpop.f32.mrb[0].mxu0
    %v175 = vadd.f32 0.0, %v174
    %v176 = vpop.f32.mrb[0].mxu0
    %177 = vdwg.mxu0
    %v186 = vunpack.c.l.b16 %v89
    %v187 = vunpack.c.l.b16 %v90
    %v188 = vunpack.c.l.b16 %v91
    %v189 = vunpack.c.l.b16 %v92
    %v190 = vunpack.c.l.b16 %v93
    %v191 = vunpack.c.l.b16 %v94
    %v192 = vunpack.c.l.b16 %v95
    %v193 = vunpack.c.l.b16 %v96
    %v194 = vpack.c.b16 %v187, %v186
    %v195 = vpack.c.b16 %v189, %v188
    %v196 = vpack.c.b16 %v191, %v190
    %v197 = vpack.c.b16 %v193, %v192
    %v203 = vsel %vm133, %v88, 0
    %205 = vmatprep.subr.bf16.mxu0 0
    %206 = vmatpush1.bf16.msra.mxu0 %v194
    %207 = vmatprep.subr.bf16.mxu0 0
    %208 = vmatpush1.bf16.msra.mxu0 %v195
    %209 = vmatprep.subr.bf16.mxu0 0
    %210 = vmatpush1.bf16.msra.mxu0 %v196
    %211 = vmatprep.subr.bf16.mxu0 0
    %212 = vmatpush1.bf16.msra.mxu0 %v197
    %213 = vmatprep.subr.bf16.mxu0 0
    %214 = vmatpush1.bf16.msra.mxu0 0
    %215 = vmatprep.subr.bf16.mxu0 0
    %216 = vmatpush1.bf16.msra.mxu0 0
    %217 = vmatprep.subr.bf16.mxu0 0
    %218 = vmatpush1.bf16.msra.mxu0 0
    %219 = vmatprep.subr.bf16.mxu0 0
    %220 = vmatpush1.bf16.msra.mxu0 0
    %221 = vmatprep.subr.bf16.mxu0 0
    %222 = vmatpush1.bf16.msra.mxu0 0
    %223 = vmatprep.subr.bf16.mxu0 0
    %224 = vmatpush1.bf16.msra.mxu0 0
    %225 = vmatprep.subr.bf16.mxu0 0
    %226 = vmatpush1.bf16.msra.mxu0 0
    %227 = vmatprep.subr.bf16.mxu0 0
    %228 = vmatpush1.bf16.msra.mxu0 0
    %229 = vmatprep.subr.bf16.mxu0 0
    %230 = vmatpush1.bf16.msra.mxu0 0
    %231 = vmatprep.subr.bf16.mxu0 0
    %232 = vmatpush1.bf16.msra.mxu0 0
    %233 = vmatprep.subr.bf16.mxu0 0
    %234 = vmatpush1.bf16.msra.mxu0 0
    %235 = vmatprep.subr.bf16.mxu0 0
    %236 = vmatpush1.bf16.msra.mxu0 0
    %237 = vmatprep.mubr.bf16.mxu0 0
    %238 = vmatmul.mubr.bf16.gmra.mrb[0].mxu0 %v203
    %v239 = vpop.f32.mrb[0].mxu0
    %v240 = vadd.f32 %v172, %v239
    %v241 = vpop.f32.mrb[0].mxu0
    %v242 = vpop.f32.mrb[0].mxu0
    %v243 = vadd.f32 %v175, %v242
    %v244 = vpop.f32.mrb[0].mxu0
    %245 = vdwg.mxu0
    %v246 = vld [vmem:[#allocation4 + $0x2] sm:$0xff]
    %v247 = vld [vmem:[#allocation4 + $0xa] sm:$0xff]
    %v248 = vpack.c.bf16 %v247, %v246
    %s249 = scalar_lea.vmem [#allocation7], 64
    %v250 = vld [vmem:[%s249] sm:$0xf]
    %v251 = vld [vmem:[%s249 + $0x4] sm:$0xf]
    %v252 = vld [vmem:[%s249 + $0x8] sm:$0xf]
    %v253 = vld [vmem:[%s249 + $0xc] sm:$0xf]
    %v254 = vld [vmem:[%s249 + $0x10] sm:$0xf]
    %v255 = vld [vmem:[%s249 + $0x14] sm:$0xf]
    %v256 = vld [vmem:[%s249 + $0x18] sm:$0xf]
    %v257 = vld [vmem:[%s249 + $0x1c] sm:$0xf]
    %v266 = vunpack.c.l.b16 %v250
    %v267 = vunpack.c.l.b16 %v251
    %v268 = vunpack.c.l.b16 %v252
    %v269 = vunpack.c.l.b16 %v253
    %v270 = vunpack.c.l.b16 %v254
    %v271 = vunpack.c.l.b16 %v255
    %v272 = vunpack.c.l.b16 %v256
    %v273 = vunpack.c.l.b16 %v257
    %v274 = vpack.c.b16 %v267, %v266
    %v275 = vpack.c.b16 %v269, %v268
    %v276 = vpack.c.b16 %v271, %v270
    %v277 = vpack.c.b16 %v273, %v272
    %v283 = vsel %vm133, %v248, 0
    %285 = vmatprep.subr.bf16.mxu0 0
    %286 = vmatpush1.bf16.msra.mxu0 %v274
    %287 = vmatprep.subr.bf16.mxu0 0
    %288 = vmatpush1.bf16.msra.mxu0 %v275
    %289 = vmatprep.subr.bf16.mxu0 0
    %290 = vmatpush1.bf16.msra.mxu0 %v276
    %291 = vmatprep.subr.bf16.mxu0 0
    %292 = vmatpush1.bf16.msra.mxu0 %v277
    %293 = vmatprep.subr.bf16.mxu0 0
    %294 = vmatpush1.bf16.msra.mxu0 0
    %295 = vmatprep.subr.bf16.mxu0 0
    %296 = vmatpush1.bf16.msra.mxu0 0
    %297 = vmatprep.subr.bf16.mxu0 0
    %298 = vmatpush1.bf16.msra.mxu0 0
    %299 = vmatprep.subr.bf16.mxu0 0
    %300 = vmatpush1.bf16.msra.mxu0 0
    %301 = vmatprep.subr.bf16.mxu0 0
    %302 = vmatpush1.bf16.msra.mxu0 0
    %303 = vmatprep.subr.bf16.mxu0 0
    %304 = vmatpush1.bf16.msra.mxu0 0
    %305 = vmatprep.subr.bf16.mxu0 0
    %306 = vmatpush1.bf16.msra.mxu0 0
    %307 = vmatprep.subr.bf16.mxu0 0
    %308 = vmatpush1.bf16.msra.mxu0 0
    %309 = vmatprep.subr.bf16.mxu0 0
    %310 = vmatpush1.bf16.msra.mxu0 0
    %311 = vmatprep.subr.bf16.mxu0 0
    %312 = vmatpush1.bf16.msra.mxu0 0
    %313 = vmatprep.subr.bf16.mxu0 0
    %314 = vmatpush1.bf16.msra.mxu0 0
    %315 = vmatprep.subr.bf16.mxu0 0
    %316 = vmatpush1.bf16.msra.mxu0 0
    %317 = vmatprep.mubr.bf16.mxu0 0
    %318 = vmatmul.mubr.bf16.gmra.mrb[0].mxu0 %v283
    %v319 = vpop.f32.mrb[0].mxu0
    %v320 = vadd.f32 0.0, %v319
    %v321 = vpop.f32.mrb[0].mxu0
    %v322 = vpop.f32.mrb[0].mxu0
    %v323 = vadd.f32 0.0, %v322
    %v324 = vpop.f32.mrb[0].mxu0
    %325 = vdwg.mxu0
    %v326 = vadd.f32 %v240, %v320
    %v327 = vadd.f32 %v243, %v323
    %328 = vst.msk [vmem:[#allocation3] sm:$0xff] %vm133, %v326
    %329 = vst.msk [vmem:[#allocation3 + $0x8] sm:$0xff] %vm133, %v327
    %v330 = vld [vmem:[#allocation4 + $0x12] sm:$0xff]
    %v331 = vld [vmem:[#allocation4 + $0x1a] sm:$0xff]
    %v332 = vpack.c.bf16 %v331, %v330
    %v333 = vld [vmem:[#allocation7] sm:$0xf]
    %v334 = vld [vmem:[#allocation7 + $0x4] sm:$0xf]
    %v335 = vld [vmem:[#allocation7 + $0x8] sm:$0xf]
    %v336 = vld [vmem:[#allocation7 + $0xc] sm:$0xf]
    %v337 = vld [vmem:[#allocation7 + $0x10] sm:$0xf]
    %v338 = vld [vmem:[#allocation7 + $0x14] sm:$0xf]
    %v339 = vld [vmem:[#allocation7 + $0x18] sm:$0xf]
    %v340 = vld [vmem:[#allocation7 + $0x1c] sm:$0xf]
    %v341 = vld [vmem:[#allocation4 + $0x13] sm:$0xff]
    %v342 = vld [vmem:[#allocation4 + $0x1b] sm:$0xff]
    %v343 = vpack.c.bf16 %v342, %v341
    %v344 = vld [vmem:[%s100] sm:$0xf]
    %v345 = vld [vmem:[%s100 + $0x4] sm:$0xf]
    %v346 = vld [vmem:[%s100 + $0x8] sm:$0xf]
    %v347 = vld [vmem:[%s100 + $0xc] sm:$0xf]
    %v348 = vld [vmem:[%s100 + $0x10] sm:$0xf]
    %v349 = vld [vmem:[%s100 + $0x14] sm:$0xf]
    %v350 = vld [vmem:[%s100 + $0x18] sm:$0xf]
    %v351 = vld [vmem:[%s100 + $0x1c] sm:$0xf]
    %v360 = vunpack.c.l.b16 %v344
    %v361 = vunpack.c.l.b16 %v345
    %v362 = vunpack.c.l.b16 %v346
    %v363 = vunpack.c.l.b16 %v347
    %v364 = vunpack.c.l.b16 %v348
    %v365 = vunpack.c.l.b16 %v349
    %v366 = vunpack.c.l.b16 %v350
    %v367 = vunpack.c.l.b16 %v351
    %v368 = vpack.c.b16 %v361, %v360
    %v369 = vpack.c.b16 %v363, %v362
    %v370 = vpack.c.b16 %v365, %v364
    %v371 = vpack.c.b16 %v367, %v366
    %v377 = vsel %vm133, %v343, 0
    %379 = vmatprep.subr.bf16.mxu0 0
    %380 = vmatpush1.bf16.msra.mxu0 %v368
    %381 = vmatprep.subr.bf16.mxu0 0
    %382 = vmatpush1.bf16.msra.mxu0 %v369
    %383 = vmatprep.subr.bf16.mxu0 0
    %384 = vmatpush1.bf16.msra.mxu0 %v370
    %385 = vmatprep.subr.bf16.mxu0 0
    %386 = vmatpush1.bf16.msra.mxu0 %v371
    %387 = vmatprep.subr.bf16.mxu0 0
    %388 = vmatpush1.bf16.msra.mxu0 0
    %389 = vmatprep.subr.bf16.mxu0 0
    %390 = vmatpush1.bf16.msra.mxu0 0
    %391 = vmatprep.subr.bf16.mxu0 0
    %392 = vmatpush1.bf16.msra.mxu0 0
    %393 = vmatprep.subr.bf16.mxu0 0
    %394 = vmatpush1.bf16.msra.mxu0 0
    %395 = vmatprep.subr.bf16.mxu0 0
    %396 = vmatpush1.bf16.msra.mxu0 0
    %397 = vmatprep.subr.bf16.mxu0 0
    %398 = vmatpush1.bf16.msra.mxu0 0
    %399 = vmatprep.subr.bf16.mxu0 0
    %400 = vmatpush1.bf16.msra.mxu0 0
    %401 = vmatprep.subr.bf16.mxu0 0
    %402 = vmatpush1.bf16.msra.mxu0 0
    %403 = vmatprep.subr.bf16.mxu0 0
    %404 = vmatpush1.bf16.msra.mxu0 0
    %405 = vmatprep.subr.bf16.mxu0 0
    %406 = vmatpush1.bf16.msra.mxu0 0
    %407 = vmatprep.subr.bf16.mxu0 0
    %408 = vmatpush1.bf16.msra.mxu0 0
    %409 = vmatprep.subr.bf16.mxu0 0
    %410 = vmatpush1.bf16.msra.mxu0 0
    %411 = vmatprep.mubr.bf16.mxu0 0
    %412 = vmatmul.mubr.bf16.gmra.mrb[0].mxu0 %v377
    %v413 = vpop.f32.mrb[0].mxu0
    %v414 = vadd.f32 0.0, %v413
    %v415 = vpop.f32.mrb[0].mxu0
    %v416 = vpop.f32.mrb[0].mxu0
    %v417 = vadd.f32 0.0, %v416
    %v418 = vpop.f32.mrb[0].mxu0
    %419 = vdwg.mxu0
    %v428 = vunpack.c.l.b16 %v333
    %v429 = vunpack.c.l.b16 %v334
    %v430 = vunpack.c.l.b16 %v335
    %v431 = vunpack.c.l.b16 %v336
    %v432 = vunpack.c.l.b16 %v337
    %v433 = vunpack.c.l.b16 %v338
    %v434 = vunpack.c.l.b16 %v339
    %v435 = vunpack.c.l.b16 %v340
    %v436 = vpack.c.b16 %v429, %v428
    %v437 = vpack.c.b16 %v431, %v430
    %v438 = vpack.c.b16 %v433, %v432
    %v439 = vpack.c.b16 %v435, %v434
    %v445 = vsel %vm133, %v332, 0
    %447 = vmatprep.subr.bf16.mxu0 0
    %448 = vmatpush1.bf16.msra.mxu0 %v436
    %449 = vmatprep.subr.bf16.mxu0 0
    %450 = vmatpush1.bf16.msra.mxu0 %v437
    %451 = vmatprep.subr.bf16.mxu0 0
    %452 = vmatpush1.bf16.msra.mxu0 %v438
    %453 = vmatprep.subr.bf16.mxu0 0
    %454 = vmatpush1.bf16.msra.mxu0 %v439
    %455 = vmatprep.subr.bf16.mxu0 0
    %456 = vmatpush1.bf16.msra.mxu0 0
    %457 = vmatprep.subr.bf16.mxu0 0
    %458 = vmatpush1.bf16.msra.mxu0 0
    %459 = vmatprep.subr.bf16.mxu0 0
    %460 = vmatpush1.bf16.msra.mxu0 0
    %461 = vmatprep.subr.bf16.mxu0 0
    %462 = vmatpush1.bf16.msra.mxu0 0
    %463 = vmatprep.subr.bf16.mxu0 0
    %464 = vmatpush1.bf16.msra.mxu0 0
    %465 = vmatprep.subr.bf16.mxu0 0
    %466 = vmatpush1.bf16.msra.mxu0 0
    %467 = vmatprep.subr.bf16.mxu0 0
    %468 = vmatpush1.bf16.msra.mxu0 0
    %469 = vmatprep.subr.bf16.mxu0 0
    %470 = vmatpush1.bf16.msra.mxu0 0
    %471 = vmatprep.subr.bf16.mxu0 0
    %472 = vmatpush1.bf16.msra.mxu0 0
    %473 = vmatprep.subr.bf16.mxu0 0
    %474 = vmatpush1.bf16.msra.mxu0 0
    %475 = vmatprep.subr.bf16.mxu0 0
    %476 = vmatpush1.bf16.msra.mxu0 0
    %477 = vmatprep.subr.bf16.mxu0 0
    %478 = vmatpush1.bf16.msra.mxu0 0
    %479 = vmatprep.mubr.bf16.mxu0 0
    %480 = vmatmul.mubr.bf16.gmra.mrb[0].mxu0 %v445
    %v481 = vpop.f32.mrb[0].mxu0
    %v482 = vadd.f32 %v414, %v481
    %v483 = vpop.f32.mrb[0].mxu0
    %v484 = vpop.f32.mrb[0].mxu0
    %v485 = vadd.f32 %v417, %v484
    %v486 = vpop.f32.mrb[0].mxu0
    %487 = vdwg.mxu0
    %v488 = vld [vmem:[#allocation4 + $0x14] sm:$0xff]
    %v489 = vld [vmem:[#allocation4 + $0x1c] sm:$0xff]
    %v490 = vpack.c.bf16 %v489, %v488
    %v491 = vld [vmem:[%s249] sm:$0xf]
    %v492 = vld [vmem:[%s249 + $0x4] sm:$0xf]
    %v493 = vld [vmem:[%s249 + $0x8] sm:$0xf]
    %v494 = vld [vmem:[%s249 + $0xc] sm:$0xf]
    %v495 = vld [vmem:[%s249 + $0x10] sm:$0xf]
    %v496 = vld [vmem:[%s249 + $0x14] sm:$0xf]
    %v497 = vld [vmem:[%s249 + $0x18] sm:$0xf]
    %v498 = vld [vmem:[%s249 + $0x1c] sm:$0xf]
    %v507 = vunpack.c.l.b16 %v491
    %v508 = vunpack.c.l.b16 %v492
    %v509 = vunpack.c.l.b16 %v493
    %v510 = vunpack.c.l.b16 %v494
    %v511 = vunpack.c.l.b16 %v495
    %v512 = vunpack.c.l.b16 %v496
    %v513 = vunpack.c.l.b16 %v497
    %v514 = vunpack.c.l.b16 %v498
    %v515 = vpack.c.b16 %v508, %v507
    %v516 = vpack.c.b16 %v510, %v509
    %v517 = vpack.c.b16 %v512, %v511
    %v518 = vpack.c.b16 %v514, %v513
    %v524 = vsel %vm133, %v490, 0
    %526 = vmatprep.subr.bf16.mxu0 0
    %527 = vmatpush1.bf16.msra.mxu0 %v515
    %528 = vmatprep.subr.bf16.mxu0 0
    %529 = vmatpush1.bf16.msra.mxu0 %v516
    %530 = vmatprep.subr.bf16.mxu0 0
    %531 = vmatpush1.bf16.msra.mxu0 %v517
    %532 = vmatprep.subr.bf16.mxu0 0
    %533 = vmatpush1.bf16.msra.mxu0 %v518
    %534 = vmatprep.subr.bf16.mxu0 0
    %535 = vmatpush1.bf16.msra.mxu0 0
    %536 = vmatprep.subr.bf16.mxu0 0
    %537 = vmatpush1.bf16.msra.mxu0 0
    %538 = vmatprep.subr.bf16.mxu0 0
    %539 = vmatpush1.bf16.msra.mxu0 0
    %540 = vmatprep.subr.bf16.mxu0 0
    %541 = vmatpush1.bf16.msra.mxu0 0
    %542 = vmatprep.subr.bf16.mxu0 0
    %543 = vmatpush1.bf16.msra.mxu0 0
    %544 = vmatprep.subr.bf16.mxu0 0
    %545 = vmatpush1.bf16.msra.mxu0 0
    %546 = vmatprep.subr.bf16.mxu0 0
    %547 = vmatpush1.bf16.msra.mxu0 0
    %548 = vmatprep.subr.bf16.mxu0 0
    %549 = vmatpush1.bf16.msra.mxu0 0
    %550 = vmatprep.subr.bf16.mxu0 0
    %551 = vmatpush1.bf16.msra.mxu0 0
    %552 = vmatprep.subr.bf16.mxu0 0
    %553 = vmatpush1.bf16.msra.mxu0 0
    %554 = vmatprep.subr.bf16.mxu0 0
    %555 = vmatpush1.bf16.msra.mxu0 0
    %556 = vmatprep.subr.bf16.mxu0 0
    %557 = vmatpush1.bf16.msra.mxu0 0
    %558 = vmatprep.mubr.bf16.mxu0 0
    %559 = vmatmul.mubr.bf16.gmra.mrb[0].mxu0 %v524
    %v560 = vpop.f32.mrb[0].mxu0
    %v561 = vadd.f32 0.0, %v560
    %v562 = vpop.f32.mrb[0].mxu0
    %v563 = vpop.f32.mrb[0].mxu0
    %v564 = vadd.f32 0.0, %v563
    %v565 = vpop.f32.mrb[0].mxu0
    %566 = vdwg.mxu0
    %v567 = vadd.f32 %v482, %v561
    %v568 = vadd.f32 %v485, %v564
    %569 = vst.msk [vmem:[#allocation3 + $0x10] sm:$0xff] %vm133, %v567
    %570 = vst.msk [vmem:[#allocation3 + $0x18] sm:$0xff] %vm133, %v568
    %v571 = vld [vmem:[#allocation3] sm:$0xff]
    %v572 = vld [vmem:[#allocation3 + $0x8] sm:$0xff]
    %v573 = vld [vmem:[#allocation3 + $0x10] sm:$0xff]
    %v574 = vld [vmem:[#allocation3 + $0x18] sm:$0xff]
    %v575 = vld [vmem:[#allocation10] sm:$0xff]
    %v576 = vld [vmem:[#allocation10 + $0x8] sm:$0xff]
    %v577 = vld [vmem:[#allocation10 + $0x10] sm:$0xff]
    %v578 = vld [vmem:[#allocation10 + $0x18] sm:$0xff]
    %v579 = vld [vmem:[#allocation10 + $0x20] sm:$0xff]
    %v580 = vld [vmem:[#allocation10 + $0x28] sm:$0xff]
    %v581 = vld [vmem:[#allocation10 + $0x30] sm:$0xff]
    %v582 = vld [vmem:[#allocation10 + $0x38] sm:$0xff]
    %v583 = vsel %vm133, %v571, 0.0
    %v584 = vsel %vm133, %v572, 0.0
    %v585 = vadd.f32 %v583, %v584
    %v586 = vsel %vm133, %v573, 0.0
    %v587 = vadd.f32 %v585, %v586
    %v588 = vsel %vm133, %v574, 0.0
    %v589 = vadd.f32 %v587, %v588
    %v590 = vrot.slane %v589, 4
    %v591 = vadd.f32 %v589, %v590
    %v592 = vrot.slane %v591, 2
    %v593 = vadd.f32 %v591, %v592
    %v594 = vrot.slane %v593, 1
    %v595 = vadd.f32 %v593, %v594
    %v597 = vsel %vm133, %v595, 0
    %599 = vmatprep.subr.mxu0 0.0
    %600 = vmatpush1.msra.mxu0 %v575
    %601 = vmatprep.subr.mxu0 0.0
    %602 = vmatpush1.msra.mxu0 %v576
    %603 = vmatprep.subr.mxu0 0.0
    %604 = vmatpush1.msra.mxu0 %v577
    %605 = vmatprep.subr.mxu0 0.0
    %606 = vmatpush1.msra.mxu0 %v578
    %607 = vmatprep.subr.mxu0 0.0
    %608 = vmatpush1.msra.mxu0 %v579
    %609 = vmatprep.subr.mxu0 0.0
    %610 = vmatpush1.msra.mxu0 %v580
    %611 = vmatprep.subr.mxu0 0.0
    %612 = vmatpush1.msra.mxu0 %v581
    %613 = vmatprep.subr.mxu0 0.0
    %614 = vmatpush1.msra.mxu0 %v582
    %615 = vmatprep.subr.mxu0 0.0
    %616 = vmatpush1.msra.mxu0 0.0
    %617 = vmatprep.subr.mxu0 0.0
    %618 = vmatpush1.msra.mxu0 0.0
    %619 = vmatprep.subr.mxu0 0.0
    %620 = vmatpush1.msra.mxu0 0.0
    %621 = vmatprep.subr.mxu0 0.0
    %622 = vmatpush1.msra.mxu0 0.0
    %623 = vmatprep.subr.mxu0 0.0
    %624 = vmatpush1.msra.mxu0 0.0
    %625 = vmatprep.subr.mxu0 0.0
    %626 = vmatpush1.msra.mxu0 0.0
    %627 = vmatprep.subr.mxu0 0.0
    %628 = vmatpush1.msra.mxu0 0.0
    %629 = vmatprep.subr.mxu0 0.0
    %630 = vmatpush1.msra.mxu0 0.0
    %631 = vmatprep.subr.mxu0 0.0
    %632 = vmatpush1.msra.mxu0 0.0
    %633 = vmatprep.subr.mxu0 0.0
    %634 = vmatpush1.msra.mxu0 0.0
    %635 = vmatprep.subr.mxu0 0.0
    %636 = vmatpush1.msra.mxu0 0.0
    %637 = vmatprep.subr.mxu0 0.0
    %638 = vmatpush1.msra.mxu0 0.0
    %639 = vmatprep.subr.mxu0 0.0
    %640 = vmatpush1.msra.mxu0 0.0
    %641 = vmatprep.subr.mxu0 0.0
    %642 = vmatpush1.msra.mxu0 0.0
    %643 = vmatprep.subr.mxu0 0.0
    %644 = vmatpush1.msra.mxu0 0.0
    %645 = vmatprep.subr.mxu0 0.0
    %646 = vmatpush1.msra.mxu0 0.0
    %647 = vmatprep.subr.mxu0 0.0
    %648 = vmatpush1.msra.mxu0 0.0
    %649 = vmatprep.subr.mxu0 0.0
    %650 = vmatpush1.msra.mxu0 0.0
    %651 = vmatprep.subr.mxu0 0.0
    %652 = vmatpush1.msra.mxu0 0.0
    %653 = vmatprep.subr.mxu0 0.0
    %654 = vmatpush1.msra.mxu0 0.0
    %655 = vmatprep.subr.mxu0 0.0
    %656 = vmatpush1.msra.mxu0 0.0
    %657 = vmatprep.subr.mxu0 0.0
    %658 = vmatpush1.msra.mxu0 0.0
    %659 = vmatprep.subr.mxu0 0.0
    %660 = vmatpush1.msra.mxu0 0.0
    %661 = vmatprep.subr.mxu0 0.0
    %662 = vmatpush1.msra.mxu0 0.0
    %663 = vmatprep.mubr.f32.mxu0 0.0
    %664 = vmatmul.mubr.f32.gmra.mrb[0].mxu0 %v597
    %v665 = vpop.f32.mrb[0].mxu0
    %v666 = vadd.f32 0.0, %v665
    %v667 = vpop.f32.mrb[0].mxu0
    %668 = vdwg.mxu0
    %v669 = vmul.f32 %v666, 0.001953125
    %v670 = vlaneseq
    %v671 = vshrl.u32 %v670, 7
    %v672 = vsub.s32 0, %v671
    %v673 = vrot.slane %v669, %v672
    %v674 = vsub.f32 %v571, %v673
    %v675 = vsub.f32 %v572, %v673
    %v676 = vsub.f32 %v573, %v673
    %v677 = vsub.f32 %v574, %v673
    %v678 = vmul.f32 %v674, %v674
    %v679 = vmul.f32 %v675, %v675
    %v680 = vmul.f32 %v676, %v676
    %v681 = vmul.f32 %v677, %v677
    %v682 = vsel %vm133, %v678, 0.0
    %v683 = vsel %vm133, %v679, 0.0
    %v684 = vadd.f32 %v682, %v683
    %v685 = vsel %vm133, %v680, 0.0
    %v686 = vadd.f32 %v684, %v685
    %v687 = vsel %vm133, %v681, 0.0
    %v688 = vadd.f32 %v686, %v687
    %v689 = vrot.slane %v688, 4
    %v690 = vadd.f32 %v688, %v689
    %v691 = vrot.slane %v690, 2
    %v692 = vadd.f32 %v690, %v691
    %v693 = vrot.slane %v692, 1
    %v694 = vadd.f32 %v692, %v693
    %v696 = vsel %vm133, %v694, 0
    %698 = vmatprep.subr.mxu0 0.0
    %699 = vmatpush1.msra.mxu0 %v575
    %700 = vmatprep.subr.mxu0 0.0
    %701 = vmatpush1.msra.mxu0 %v576
    %702 = vmatprep.subr.mxu0 0.0
    %703 = vmatpush1.msra.mxu0 %v577
    %704 = vmatprep.subr.mxu0 0.0
    %705 = vmatpush1.msra.mxu0 %v578
    %706 = vmatprep.subr.mxu0 0.0
    %707 = vmatpush1.msra.mxu0 %v579
    %708 = vmatprep.subr.mxu0 0.0
    %709 = vmatpush1.msra.mxu0 %v580
    %710 = vmatprep.subr.mxu0 0.0
    %711 = vmatpush1.msra.mxu0 %v581
    %712 = vmatprep.subr.mxu0 0.0
    %713 = vmatpush1.msra.mxu0 %v582
    %714 = vmatprep.subr.mxu0 0.0
    %715 = vmatpush1.msra.mxu0 0.0
    %716 = vmatprep.subr.mxu0 0.0
    %717 = vmatpush1.msra.mxu0 0.0
    %718 = vmatprep.subr.mxu0 0.0
    %719 = vmatpush1.msra.mxu0 0.0
    %720 = vmatprep.subr.mxu0 0.0
    %721 = vmatpush1.msra.mxu0 0.0
    %722 = vmatprep.subr.mxu0 0.0
    %723 = vmatpush1.msra.mxu0 0.0
    %724 = vmatprep.subr.mxu0 0.0
    %725 = vmatpush1.msra.mxu0 0.0
    %726 = vmatprep.subr.mxu0 0.0
    %727 = vmatpush1.msra.mxu0 0.0
    %728 = vmatprep.subr.mxu0 0.0
    %729 = vmatpush1.msra.mxu0 0.0
    %730 = vmatprep.subr.mxu0 0.0
    %731 = vmatpush1.msra.mxu0 0.0
    %732 = vmatprep.subr.mxu0 0.0
    %733 = vmatpush1.msra.mxu0 0.0
    %734 = vmatprep.subr.mxu0 0.0
    %735 = vmatpush1.msra.mxu0 0.0
    %736 = vmatprep.subr.mxu0 0.0
    %737 = vmatpush1.msra.mxu0 0.0
    %738 = vmatprep.subr.mxu0 0.0
    %739 = vmatpush1.msra.mxu0 0.0
    %740 = vmatprep.subr.mxu0 0.0
    %741 = vmatpush1.msra.mxu0 0.0
    %742 = vmatprep.subr.mxu0 0.0
    %743 = vmatpush1.msra.mxu0 0.0
    %744 = vmatprep.subr.mxu0 0.0
    %745 = vmatpush1.msra.mxu0 0.0
    %746 = vmatprep.subr.mxu0 0.0
    %747 = vmatpush1.msra.mxu0 0.0
    %748 = vmatprep.subr.mxu0 0.0
    %749 = vmatpush1.msra.mxu0 0.0
    %750 = vmatprep.subr.mxu0 0.0
    %751 = vmatpush1.msra.mxu0 0.0
    %752 = vmatprep.subr.mxu0 0.0
    %753 = vmatpush1.msra.mxu0 0.0
    %754 = vmatprep.subr.mxu0 0.0
    %755 = vmatpush1.msra.mxu0 0.0
    %756 = vmatprep.subr.mxu0 0.0
    %757 = vmatpush1.msra.mxu0 0.0
    %758 = vmatprep.subr.mxu0 0.0
    %759 = vmatpush1.msra.mxu0 0.0
    %760 = vmatprep.subr.mxu0 0.0
    %761 = vmatpush1.msra.mxu0 0.0
    %762 = vmatprep.mubr.f32.mxu0 0.0
    %763 = vmatmul.mubr.f32.gmra.mrb[0].mxu0 %v696
    %v764 = vpop.f32.mrb[0].mxu0
    %v765 = vadd.f32 0.0, %v764
    %v766 = vpop.f32.mrb[0].mxu0
    %767 = vdwg.mxu0
    %v768 = vmul.f32 %v765, 0.001953125
    %v769 = vld [vmem:[%s4] sm:$0x1]
    %v770 = vadd.f32 %v768, 1e-05
    %v771 = vrsqrt.pop %v770
    %v772 = vmul.f32 %v769, %v771
    %v773 = vld [vmem:[%s5] sm:$0x1]
    %v774 = vmul.f32 %v669, %v772
    %v775 = vsub.f32 %v773, %v774
    %v777 = vlaneseq
    %v778 = vshrl.u32 %v777, 7
    %v779 = vsub.s32 0, %v778
    %v780 = vrot.slane %v772, %v779
    %v782 = vmul.f32 %v571, %v780
    %v783 = vmul.f32 %v572, %v780
    %v784 = vmul.f32 %v573, %v780
    %v785 = vmul.f32 %v574, %v780
    %v787 = vlaneseq
    %v788 = vshrl.u32 %v787, 7
    %v789 = vsub.s32 0, %v788
    %v790 = vrot.slane %v775, %v789
    %v792 = vadd.f32 %v782, %v790
    %v793 = vadd.f32 %v783, %v790
    %v794 = vadd.f32 %v784, %v790
    %v795 = vadd.f32 %v785, %v790
    %v796 = vmax.f32 %v792, 0.0
    %v797 = vmax.f32 %v793, 0.0
    %v798 = vmax.f32 %v794, 0.0
    %v799 = vmax.f32 %v795, 0.0
    %800 = vst.msk [vmem:[#allocation2] sm:$0xff] %vm133, 0.0
    %801 = vst.msk [vmem:[#allocation2 + $0x8] sm:$0xff] %vm133, 0.0
    %802 = vst.msk [vmem:[#allocation2 + $0x10] sm:$0xff] %vm133, 0.0
    %803 = vst.msk [vmem:[#allocation2 + $0x18] sm:$0xff] %vm133, 0.0
    %804 = vst.msk [vmem:[#allocation2 + $0x20] sm:$0xff] %vm133, 0.0
    %805 = vst.msk [vmem:[#allocation2 + $0x28] sm:$0xff] %vm133, 0.0
    %806 = vst.msk [vmem:[#allocation2 + $0x30] sm:$0xff] %vm133, 0.0
    %807 = vst.msk [vmem:[#allocation2 + $0x38] sm:$0xff] %vm133, 0.0
    %808 = vst.msk [vmem:[#allocation2 + $0x8] sm:$0xff] %vm133, %v796
    %809 = vst.msk [vmem:[#allocation2 + $0x10] sm:$0xff] %vm133, %v797
    %810 = vst.msk [vmem:[#allocation2 + $0x28] sm:$0xff] %vm133, %v798
    %811 = vst.msk [vmem:[#allocation2 + $0x30] sm:$0xff] %vm133, %v799
    %v812 = vld [vmem:[#allocation2 + $0x7] sm:$0xff]
    %v813 = vld [vmem:[#allocation2 + $0xf] sm:$0xff]
    %v814 = vpack.c.bf16 %v813, %v812
    %v815 = vld [vmem:[#allocation9] sm:$0xf]
    %v816 = vld [vmem:[#allocation9 + $0x4] sm:$0xf]
    %v817 = vld [vmem:[#allocation9 + $0x8] sm:$0xf]
    %v818 = vld [vmem:[#allocation9 + $0xc] sm:$0xf]
    %v819 = vld [vmem:[#allocation9 + $0x10] sm:$0xf]
    %v820 = vld [vmem:[#allocation9 + $0x14] sm:$0xf]
    %v821 = vld [vmem:[#allocation9 + $0x18] sm:$0xf]
    %v822 = vld [vmem:[#allocation9 + $0x1c] sm:$0xf]
    %v823 = vld [vmem:[#allocation2 + $0x8] sm:$0xff]
    %v824 = vld [vmem:[#allocation2 + $0x10] sm:$0xff]
    %v825 = vpack.c.bf16 %v824, %v823
    %s826 = scalar_lea.vmem [#allocation9], 32
    %v827 = vld [vmem:[%s826] sm:$0xf]
    %v828 = vld [vmem:[%s826 + $0x4] sm:$0xf]
    %v829 = vld [vmem:[%s826 + $0x8] sm:$0xf]
    %v830 = vld [vmem:[%s826 + $0xc] sm:$0xf]
    %v831 = vld [vmem:[%s826 + $0x10] sm:$0xf]
    %v832 = vld [vmem:[%s826 + $0x14] sm:$0xf]
    %v833 = vld [vmem:[%s826 + $0x18] sm:$0xf]
    %v834 = vld [vmem:[%s826 + $0x1c] sm:$0xf]
    %v843 = vunpack.c.l.b16 %v827
    %v844 = vunpack.c.l.b16 %v828
    %v845 = vunpack.c.l.b16 %v829
    %v846 = vunpack.c.l.b16 %v830
    %v847 = vunpack.c.l.b16 %v831
    %v848 = vunpack.c.l.b16 %v832
    %v849 = vunpack.c.l.b16 %v833
    %v850 = vunpack.c.l.b16 %v834
    %v851 = vpack.c.b16 %v844, %v843
    %v852 = vpack.c.b16 %v846, %v845
    %v853 = vpack.c.b16 %v848, %v847
    %v854 = vpack.c.b16 %v850, %v849
    %v860 = vsel %vm133, %v825, 0
    %862 = vmatprep.subr.bf16.mxu0 0
    %863 = vmatpush1.bf16.msra.mxu0 %v851
    %864 = vmatprep.subr.bf16.mxu0 0
    %865 = vmatpush1.bf16.msra.mxu0 %v852
    %866 = vmatprep.subr.bf16.mxu0 0
    %867 = vmatpush1.bf16.msra.mxu0 %v853
    %868 = vmatprep.subr.bf16.mxu0 0
    %869 = vmatpush1.bf16.msra.mxu0 %v854
    %870 = vmatprep.subr.bf16.mxu0 0
    %871 = vmatpush1.bf16.msra.mxu0 0
    %872 = vmatprep.subr.bf16.mxu0 0
    %873 = vmatpush1.bf16.msra.mxu0 0
    %874 = vmatprep.subr.bf16.mxu0 0
    %875 = vmatpush1.bf16.msra.mxu0 0
    %876 = vmatprep.subr.bf16.mxu0 0
    %877 = vmatpush1.bf16.msra.mxu0 0
    %878 = vmatprep.subr.bf16.mxu0 0
    %879 = vmatpush1.bf16.msra.mxu0 0
    %880 = vmatprep.subr.bf16.mxu0 0
    %881 = vmatpush1.bf16.msra.mxu0 0
    %882 = vmatprep.subr.bf16.mxu0 0
    %883 = vmatpush1.bf16.msra.mxu0 0
    %884 = vmatprep.subr.bf16.mxu0 0
    %885 = vmatpush1.bf16.msra.mxu0 0
    %886 = vmatprep.subr.bf16.mxu0 0
    %887 = vmatpush1.bf16.msra.mxu0 0
    %888 = vmatprep.subr.bf16.mxu0 0
    %889 = vmatpush1.bf16.msra.mxu0 0
    %890 = vmatprep.subr.bf16.mxu0 0
    %891 = vmatpush1.bf16.msra.mxu0 0
    %892 = vmatprep.subr.bf16.mxu0 0
    %893 = vmatpush1.bf16.msra.mxu0 0
    %894 = vmatprep.mubr.bf16.mxu0 0
    %895 = vmatmul.mubr.bf16.gmra.mrb[0].mxu0 %v860
    %v896 = vpop.f32.mrb[0].mxu0
    %v897 = vadd.f32 0.0, %v896
    %v898 = vpop.f32.mrb[0].mxu0
    %v899 = vpop.f32.mrb[0].mxu0
    %v900 = vadd.f32 0.0, %v899
    %v901 = vpop.f32.mrb[0].mxu0
    %902 = vdwg.mxu0
    %v911 = vunpack.c.l.b16 %v815
    %v912 = vunpack.c.l.b16 %v816
    %v913 = vunpack.c.l.b16 %v817
    %v914 = vunpack.c.l.b16 %v818
    %v915 = vunpack.c.l.b16 %v819
    %v916 = vunpack.c.l.b16 %v820
    %v917 = vunpack.c.l.b16 %v821
    %v918 = vunpack.c.l.b16 %v822
    %v919 = vpack.c.b16 %v912, %v911
    %v920 = vpack.c.b16 %v914, %v913
    %v921 = vpack.c.b16 %v916, %v915
    %v922 = vpack.c.b16 %v918, %v917
    %v928 = vsel %vm133, %v814, 0
    %930 = vmatprep.subr.bf16.mxu0 0
    %931 = vmatpush1.bf16.msra.mxu0 %v919
    %932 = vmatprep.subr.bf16.mxu0 0
    %933 = vmatpush1.bf16.msra.mxu0 %v920
    %934 = vmatprep.subr.bf16.mxu0 0
    %935 = vmatpush1.bf16.msra.mxu0 %v921
    %936 = vmatprep.subr.bf16.mxu0 0
    %937 = vmatpush1.bf16.msra.mxu0 %v922
    %938 = vmatprep.subr.bf16.mxu0 0
    %939 = vmatpush1.bf16.msra.mxu0 0
    %940 = vmatprep.subr.bf16.mxu0 0
    %941 = vmatpush1.bf16.msra.mxu0 0
    %942 = vmatprep.subr.bf16.mxu0 0
    %943 = vmatpush1.bf16.msra.mxu0 0
    %944 = vmatprep.subr.bf16.mxu0 0
    %945 = vmatpush1.bf16.msra.mxu0 0
    %946 = vmatprep.subr.bf16.mxu0 0
    %947 = vmatpush1.bf16.msra.mxu0 0
    %948 = vmatprep.subr.bf16.mxu0 0
    %949 = vmatpush1.bf16.msra.mxu0 0
    %950 = vmatprep.subr.bf16.mxu0 0
    %951 = vmatpush1.bf16.msra.mxu0 0
    %952 = vmatprep.subr.bf16.mxu0 0
    %953 = vmatpush1.bf16.msra.mxu0 0
    %954 = vmatprep.subr.bf16.mxu0 0
    %955 = vmatpush1.bf16.msra.mxu0 0
    %956 = vmatprep.subr.bf16.mxu0 0
    %957 = vmatpush1.bf16.msra.mxu0 0
    %958 = vmatprep.subr.bf16.mxu0 0
    %959 = vmatpush1.bf16.msra.mxu0 0
    %960 = vmatprep.subr.bf16.mxu0 0
    %961 = vmatpush1.bf16.msra.mxu0 0
    %962 = vmatprep.mubr.bf16.mxu0 0
    %963 = vmatmul.mubr.bf16.gmra.mrb[0].mxu0 %v928
    %v964 = vpop.f32.mrb[0].mxu0
    %v965 = vadd.f32 %v897, %v964
    %v966 = vpop.f32.mrb[0].mxu0
    %v967 = vpop.f32.mrb[0].mxu0
    %v968 = vadd.f32 %v900, %v967
    %v969 = vpop.f32.mrb[0].mxu0
    %970 = vdwg.mxu0
    %v971 = vld [vmem:[#allocation2 + $0x9] sm:$0xff]
    %v972 = vld [vmem:[#allocation2 + $0x11] sm:$0xff]
    %v973 = vpack.c.bf16 %v972, %v971
    %s974 = scalar_lea.vmem [#allocation9], 64
    %v975 = vld [vmem:[%s974] sm:$0xf]
    %v976 = vld [vmem:[%s974 + $0x4] sm:$0xf]
    %v977 = vld [vmem:[%s974 + $0x8] sm:$0xf]
    %v978 = vld [vmem:[%s974 + $0xc] sm:$0xf]
    %v979 = vld [vmem:[%s974 + $0x10] sm:$0xf]
    %v980 = vld [vmem:[%s974 + $0x14] sm:$0xf]
    %v981 = vld [vmem:[%s974 + $0x18] sm:$0xf]
    %v982 = vld [vmem:[%s974 + $0x1c] sm:$0xf]
    %v991 = vunpack.c.l.b16 %v975
    %v992 = vunpack.c.l.b16 %v976
    %v993 = vunpack.c.l.b16 %v977
    %v994 = vunpack.c.l.b16 %v978
    %v995 = vunpack.c.l.b16 %v979
    %v996 = vunpack.c.l.b16 %v980
    %v997 = vunpack.c.l.b16 %v981
    %v998 = vunpack.c.l.b16 %v982
    %v999 = vpack.c.b16 %v992, %v991
    %v1000 = vpack.c.b16 %v994, %v993
    %v1001 = vpack.c.b16 %v996, %v995
    %v1002 = vpack.c.b16 %v998, %v997
    %v1008 = vsel %vm133, %v973, 0
    %1010 = vmatprep.subr.bf16.mxu0 0
    %1011 = vmatpush1.bf16.msra.mxu0 %v999
    %1012 = vmatprep.subr.bf16.mxu0 0
    %1013 = vmatpush1.bf16.msra.mxu0 %v1000
    %1014 = vmatprep.subr.bf16.mxu0 0
    %1015 = vmatpush1.bf16.msra.mxu0 %v1001
    %1016 = vmatprep.subr.bf16.mxu0 0
    %1017 = vmatpush1.bf16.msra.mxu0 %v1002
    %1018 = vmatprep.subr.bf16.mxu0 0
    %1019 = vmatpush1.bf16.msra.mxu0 0
    %1020 = vmatprep.subr.bf16.mxu0 0
    %1021 = vmatpush1.bf16.msra.mxu0 0
    %1022 = vmatprep.subr.bf16.mxu0 0
    %1023 = vmatpush1.bf16.msra.mxu0 0
    %1024 = vmatprep.subr.bf16.mxu0 0
    %1025 = vmatpush1.bf16.msra.mxu0 0
    %1026 = vmatprep.subr.bf16.mxu0 0
    %1027 = vmatpush1.bf16.msra.mxu0 0
    %1028 = vmatprep.subr.bf16.mxu0 0
    %1029 = vmatpush1.bf16.msra.mxu0 0
    %1030 = vmatprep.subr.bf16.mxu0 0
    %1031 = vmatpush1.bf16.msra.mxu0 0
    %1032 = vmatprep.subr.bf16.mxu0 0
    %1033 = vmatpush1.bf16.msra.mxu0 0
    %1034 = vmatprep.subr.bf16.mxu0 0
    %1035 = vmatpush1.bf16.msra.mxu0 0
    %1036 = vmatprep.subr.bf16.mxu0 0
    %1037 = vmatpush1.bf16.msra.mxu0 0
    %1038 = vmatprep.subr.bf16.mxu0 0
    %1039 = vmatpush1.bf16.msra.mxu0 0
    %1040 = vmatprep.subr.bf16.mxu0 0
    %1041 = vmatpush1.bf16.msra.mxu0 0
    %1042 = vmatprep.mubr.bf16.mxu0 0
    %1043 = vmatmul.mubr.bf16.gmra.mrb[0].mxu0 %v1008
    %v1044 = vpop.f32.mrb[0].mxu0
    %v1045 = vadd.f32 0.0, %v1044
    %v1046 = vpop.f32.mrb[0].mxu0
    %v1047 = vpop.f32.mrb[0].mxu0
    %v1048 = vadd.f32 0.0, %v1047
    %v1049 = vpop.f32.mrb[0].mxu0
    %1050 = vdwg.mxu0
    %v1051 = vadd.f32 %v965, %v1045
    %v1052 = vadd.f32 %v968, %v1048
    %1053 = vst.msk [vmem:[#allocation3] sm:$0xff] %vm133, %v1051
    %1054 = vst.msk [vmem:[#allocation3 + $0x8] sm:$0xff] %vm133, %v1052
    %v1055 = vld [vmem:[#allocation2 + $0x27] sm:$0xff]
    %v1056 = vld [vmem:[#allocation2 + $0x2f] sm:$0xff]
    %v1057 = vpack.c.bf16 %v1056, %v1055
    %v1058 = vld [vmem:[#allocation9] sm:$0xf]
    %v1059 = vld [vmem:[#allocation9 + $0x4] sm:$0xf]
    %v1060 = vld [vmem:[#allocation9 + $0x8] sm:$0xf]
    %v1061 = vld [vmem:[#allocation9 + $0xc] sm:$0xf]
    %v1062 = vld [vmem:[#allocation9 + $0x10] sm:$0xf]
    %v1063 = vld [vmem:[#allocation9 + $0x14] sm:$0xf]
    %v1064 = vld [vmem:[#allocation9 + $0x18] sm:$0xf]
    %v1065 = vld [vmem:[#allocation9 + $0x1c] sm:$0xf]
    %v1066 = vld [vmem:[#allocation2 + $0x28] sm:$0xff]
    %v1067 = vld [vmem:[#allocation2 + $0x30] sm:$0xff]
    %v1068 = vpack.c.bf16 %v1067, %v1066
    %v1069 = vld [vmem:[%s826] sm:$0xf]
    %v1070 = vld [vmem:[%s826 + $0x4] sm:$0xf]
    %v1071 = vld [vmem:[%s826 + $0x8] sm:$0xf]
    %v1072 = vld [vmem:[%s826 + $0xc] sm:$0xf]
    %v1073 = vld [vmem:[%s826 + $0x10] sm:$0xf]
    %v1074 = vld [vmem:[%s826 + $0x14] sm:$0xf]
    %v1075 = vld [vmem:[%s826 + $0x18] sm:$0xf]
    %v1076 = vld [vmem:[%s826 + $0x1c] sm:$0xf]
    %v1085 = vunpack.c.l.b16 %v1069
    %v1086 = vunpack.c.l.b16 %v1070
    %v1087 = vunpack.c.l.b16 %v1071
    %v1088 = vunpack.c.l.b16 %v1072
    %v1089 = vunpack.c.l.b16 %v1073
    %v1090 = vunpack.c.l.b16 %v1074
    %v1091 = vunpack.c.l.b16 %v1075
    %v1092 = vunpack.c.l.b16 %v1076
    %v1093 = vpack.c.b16 %v1086, %v1085
    %v1094 = vpack.c.b16 %v1088, %v1087
    %v1095 = vpack.c.b16 %v1090, %v1089
    %v1096 = vpack.c.b16 %v1092, %v1091
    %v1102 = vsel %vm133, %v1068, 0
    %1104 = vmatprep.subr.bf16.mxu0 0
    %1105 = vmatpush1.bf16.msra.mxu0 %v1093
    %1106 = vmatprep.subr.bf16.mxu0 0
    %1107 = vmatpush1.bf16.msra.mxu0 %v1094
    %1108 = vmatprep.subr.bf16.mxu0 0
    %1109 = vmatpush1.bf16.msra.mxu0 %v1095
    %1110 = vmatprep.subr.bf16.mxu0 0
    %1111 = vmatpush1.bf16.msra.mxu0 %v1096
    %1112 = vmatprep.subr.bf16.mxu0 0
    %1113 = vmatpush1.bf16.msra.mxu0 0
    %1114 = vmatprep.subr.bf16.mxu0 0
    %1115 = vmatpush1.bf16.msra.mxu0 0
    %1116 = vmatprep.subr.bf16.mxu0 0
    %1117 = vmatpush1.bf16.msra.mxu0 0
    %1118 = vmatprep.subr.bf16.mxu0 0
    %1119 = vmatpush1.bf16.msra.mxu0 0
    %1120 = vmatprep.subr.bf16.mxu0 0
    %1121 = vmatpush1.bf16.msra.mxu0 0
    %1122 = vmatprep.subr.bf16.mxu0 0
    %1123 = vmatpush1.bf16.msra.mxu0 0
    %1124 = vmatprep.subr.bf16.mxu0 0
    %1125 = vmatpush1.bf16.msra.mxu0 0
    %1126 = vmatprep.subr.bf16.mxu0 0
    %1127 = vmatpush1.bf16.msra.mxu0 0
    %1128 = vmatprep.subr.bf16.mxu0 0
    %1129 = vmatpush1.bf16.msra.mxu0 0
    %1130 = vmatprep.subr.bf16.mxu0 0
    %1131 = vmatpush1.bf16.msra.mxu0 0
    %1132 = vmatprep.subr.bf16.mxu0 0
    %1133 = vmatpush1.bf16.msra.mxu0 0
    %1134 = vmatprep.subr.bf16.mxu0 0
    %1135 = vmatpush1.bf16.msra.mxu0 0
    %1136 = vmatprep.mubr.bf16.mxu0 0
    %1137 = vmatmul.mubr.bf16.gmra.mrb[0].mxu0 %v1102
    %v1138 = vpop.f32.mrb[0].mxu0
    %v1139 = vadd.f32 0.0, %v1138
    %v1140 = vpop.f32.mrb[0].mxu0
    %v1141 = vpop.f32.mrb[0].mxu0
    %v1142 = vadd.f32 0.0, %v1141
    %v1143 = vpop.f32.mrb[0].mxu0
    %1144 = vdwg.mxu0
    %v1153 = vunpack.c.l.b16 %v1058
    %v1154 = vunpack.c.l.b16 %v1059
    %v1155 = vunpack.c.l.b16 %v1060
    %v1156 = vunpack.c.l.b16 %v1061
    %v1157 = vunpack.c.l.b16 %v1062
    %v1158 = vunpack.c.l.b16 %v1063
    %v1159 = vunpack.c.l.b16 %v1064
    %v1160 = vunpack.c.l.b16 %v1065
    %v1161 = vpack.c.b16 %v1154, %v1153
    %v1162 = vpack.c.b16 %v1156, %v1155
    %v1163 = vpack.c.b16 %v1158, %v1157
    %v1164 = vpack.c.b16 %v1160, %v1159
    %v1170 = vsel %vm133, %v1057, 0
    %1172 = vmatprep.subr.bf16.mxu0 0
    %1173 = vmatpush1.bf16.msra.mxu0 %v1161
    %1174 = vmatprep.subr.bf16.mxu0 0
    %1175 = vmatpush1.bf16.msra.mxu0 %v1162
    %1176 = vmatprep.subr.bf16.mxu0 0
    %1177 = vmatpush1.bf16.msra.mxu0 %v1163
    %1178 = vmatprep.subr.bf16.mxu0 0
    %1179 = vmatpush1.bf16.msra.mxu0 %v1164
    %1180 = vmatprep.subr.bf16.mxu0 0
    %1181 = vmatpush1.bf16.msra.mxu0 0
    %1182 = vmatprep.subr.bf16.mxu0 0
    %1183 = vmatpush1.bf16.msra.mxu0 0
    %1184 = vmatprep.subr.bf16.mxu0 0
    %1185 = vmatpush1.bf16.msra.mxu0 0
    %1186 = vmatprep.subr.bf16.mxu0 0
    %1187 = vmatpush1.bf16.msra.mxu0 0
    %1188 = vmatprep.subr.bf16.mxu0 0
    %1189 = vmatpush1.bf16.msra.mxu0 0
    %1190 = vmatprep.subr.bf16.mxu0 0
    %1191 = vmatpush1.bf16.msra.mxu0 0
    %1192 = vmatprep.subr.bf16.mxu0 0
    %1193 = vmatpush1.bf16.msra.mxu0 0
    %1194 = vmatprep.subr.bf16.mxu0 0
    %1195 = vmatpush1.bf16.msra.mxu0 0
    %1196 = vmatprep.subr.bf16.mxu0 0
    %1197 = vmatpush1.bf16.msra.mxu0 0
    %1198 = vmatprep.subr.bf16.mxu0 0
    %1199 = vmatpush1.bf16.msra.mxu0 0
    %1200 = vmatprep.subr.bf16.mxu0 0
    %1201 = vmatpush1.bf16.msra.mxu0 0
    %1202 = vmatprep.subr.bf16.mxu0 0
    %1203 = vmatpush1.bf16.msra.mxu0 0
    %1204 = vmatprep.mubr.bf16.mxu0 0
    %1205 = vmatmul.mubr.bf16.gmra.mrb[0].mxu0 %v1170
    %v1206 = vpop.f32.mrb[0].mxu0
    %v1207 = vadd.f32 %v1139, %v1206
    %v1208 = vpop.f32.mrb[0].mxu0
    %v1209 = vpop.f32.mrb[0].mxu0
    %v1210 = vadd.f32 %v1142, %v1209
    %v1211 = vpop.f32.mrb[0].mxu0
    %1212 = vdwg.mxu0
    %v1213 = vld [vmem:[#allocation2 + $0x29] sm:$0xff]
    %v1214 = vld [vmem:[#allocation2 + $0x31] sm:$0xff]
    %v1215 = vpack.c.bf16 %v1214, %v1213
    %v1216 = vld [vmem:[%s974] sm:$0xf]
    %v1217 = vld [vmem:[%s974 + $0x4] sm:$0xf]
    %v1218 = vld [vmem:[%s974 + $0x8] sm:$0xf]
    %v1219 = vld [vmem:[%s974 + $0xc] sm:$0xf]
    %v1220 = vld [vmem:[%s974 + $0x10] sm:$0xf]
    %v1221 = vld [vmem:[%s974 + $0x14] sm:$0xf]
    %v1222 = vld [vmem:[%s974 + $0x18] sm:$0xf]
    %v1223 = vld [vmem:[%s974 + $0x1c] sm:$0xf]
    %v1232 = vunpack.c.l.b16 %v1216
    %v1233 = vunpack.c.l.b16 %v1217
    %v1234 = vunpack.c.l.b16 %v1218
    %v1235 = vunpack.c.l.b16 %v1219
    %v1236 = vunpack.c.l.b16 %v1220
    %v1237 = vunpack.c.l.b16 %v1221
    %v1238 = vunpack.c.l.b16 %v1222
    %v1239 = vunpack.c.l.b16 %v1223
    %v1240 = vpack.c.b16 %v1233, %v1232
    %v1241 = vpack.c.b16 %v1235, %v1234
    %v1242 = vpack.c.b16 %v1237, %v1236
    %v1243 = vpack.c.b16 %v1239, %v1238
    %v1249 = vsel %vm133, %v1215, 0
    %1251 = vmatprep.subr.bf16.mxu0 0
    %1252 = vmatpush1.bf16.msra.mxu0 %v1240
    %1253 = vmatprep.subr.bf16.mxu0 0
    %1254 = vmatpush1.bf16.msra.mxu0 %v1241
    %1255 = vmatprep.subr.bf16.mxu0 0
    %1256 = vmatpush1.bf16.msra.mxu0 %v1242
    %1257 = vmatprep.subr.bf16.mxu0 0
    %1258 = vmatpush1.bf16.msra.mxu0 %v1243
    %1259 = vmatprep.subr.bf16.mxu0 0
    %1260 = vmatpush1.bf16.msra.mxu0 0
    %1261 = vmatprep.subr.bf16.mxu0 0
    %1262 = vmatpush1.bf16.msra.mxu0 0
    %1263 = vmatprep.subr.bf16.mxu0 0
    %1264 = vmatpush1.bf16.msra.mxu0 0
    %1265 = vmatprep.subr.bf16.mxu0 0
    %1266 = vmatpush1.bf16.msra.mxu0 0
    %1267 = vmatprep.subr.bf16.mxu0 0
    %1268 = vmatpush1.bf16.msra.mxu0 0
    %1269 = vmatprep.subr.bf16.mxu0 0
    %1270 = vmatpush1.bf16.msra.mxu0 0
    %1271 = vmatprep.subr.bf16.mxu0 0
    %1272 = vmatpush1.bf16.msra.mxu0 0
    %1273 = vmatprep.subr.bf16.mxu0 0
    %1274 = vmatpush1.bf16.msra.mxu0 0
    %1275 = vmatprep.subr.bf16.mxu0 0
    %1276 = vmatpush1.bf16.msra.mxu0 0
    %1277 = vmatprep.subr.bf16.mxu0 0
    %1278 = vmatpush1.bf16.msra.mxu0 0
    %1279 = vmatprep.subr.bf16.mxu0 0
    %1280 = vmatpush1.bf16.msra.mxu0 0
    %1281 = vmatprep.subr.bf16.mxu0 0
    %1282 = vmatpush1.bf16.msra.mxu0 0
    %1283 = vmatprep.mubr.bf16.mxu0 0
    %1284 = vmatmul.mubr.bf16.gmra.mrb[0].mxu0 %v1249
    %v1285 = vpop.f32.mrb[0].mxu0
    %v1286 = vadd.f32 0.0, %v1285
    %v1287 = vpop.f32.mrb[0].mxu0
    %v1288 = vpop.f32.mrb[0].mxu0
    %v1289 = vadd.f32 0.0, %v1288
    %v1290 = vpop.f32.mrb[0].mxu0
    %1291 = vdwg.mxu0
    %v1292 = vadd.f32 %v1207, %v1286
    %v1293 = vadd.f32 %v1210, %v1289
    %1294 = vst.msk [vmem:[#allocation3 + $0x10] sm:$0xff] %vm133, %v1292
    %1295 = vst.msk [vmem:[#allocation3 + $0x18] sm:$0xff] %vm133, %v1293
    %v1296 = vld [vmem:[#allocation3] sm:$0xff]
    %v1297 = vld [vmem:[#allocation3 + $0x8] sm:$0xff]
    %v1298 = vld [vmem:[#allocation3 + $0x10] sm:$0xff]
    %v1299 = vld [vmem:[#allocation3 + $0x18] sm:$0xff]
    %v1300 = vld [vmem:[#allocation10] sm:$0xff]
    %v1301 = vld [vmem:[#allocation10 + $0x8] sm:$0xff]
    %v1302 = vld [vmem:[#allocation10 + $0x10] sm:$0xff]
    %v1303 = vld [vmem:[#allocation10 + $0x18] sm:$0xff]
    %v1304 = vld [vmem:[#allocation10 + $0x20] sm:$0xff]
    %v1305 = vld [vmem:[#allocation10 + $0x28] sm:$0xff]
    %v1306 = vld [vmem:[#allocation10 + $0x30] sm:$0xff]
    %v1307 = vld [vmem:[#allocation10 + $0x38] sm:$0xff]
    %v1308 = vsel %vm133, %v1296, 0.0
    %v1309 = vsel %vm133, %v1297, 0.0
    %v1310 = vadd.f32 %v1308, %v1309
    %v1311 = vsel %vm133, %v1298, 0.0
    %v1312 = vadd.f32 %v1310, %v1311
    %v1313 = vsel %vm133, %v1299, 0.0
    %v1314 = vadd.f32 %v1312, %v1313
    %v1315 = vrot.slane %v1314, 4
    %v1316 = vadd.f32 %v1314, %v1315
    %v1317 = vrot.slane %v1316, 2
    %v1318 = vadd.f32 %v1316, %v1317
    %v1319 = vrot.slane %v1318, 1
    %v1320 = vadd.f32 %v1318, %v1319
    %v1322 = vsel %vm133, %v1320, 0
    %1324 = vmatprep.subr.mxu0 0.0
    %1325 = vmatpush1.msra.mxu0 %v1300
    %1326 = vmatprep.subr.mxu0 0.0
    %1327 = vmatpush1.msra.mxu0 %v1301
    %1328 = vmatprep.subr.mxu0 0.0
    %1329 = vmatpush1.msra.mxu0 %v1302
    %1330 = vmatprep.subr.mxu0 0.0
    %1331 = vmatpush1.msra.mxu0 %v1303
    %1332 = vmatprep.subr.mxu0 0.0
    %1333 = vmatpush1.msra.mxu0 %v1304
    %1334 = vmatprep.subr.mxu0 0.0
    %1335 = vmatpush1.msra.mxu0 %v1305
    %1336 = vmatprep.subr.mxu0 0.0
    %1337 = vmatpush1.msra.mxu0 %v1306
    %1338 = vmatprep.subr.mxu0 0.0
    %1339 = vmatpush1.msra.mxu0 %v1307
    %1340 = vmatprep.subr.mxu0 0.0
    %1341 = vmatpush1.msra.mxu0 0.0
    %1342 = vmatprep.subr.mxu0 0.0
    %1343 = vmatpush1.msra.mxu0 0.0
    %1344 = vmatprep.subr.mxu0 0.0
    %1345 = vmatpush1.msra.mxu0 0.0
    %1346 = vmatprep.subr.mxu0 0.0
    %1347 = vmatpush1.msra.mxu0 0.0
    %1348 = vmatprep.subr.mxu0 0.0
    %1349 = vmatpush1.msra.mxu0 0.0
    %1350 = vmatprep.subr.mxu0 0.0
    %1351 = vmatpush1.msra.mxu0 0.0
    %1352 = vmatprep.subr.mxu0 0.0
    %1353 = vmatpush1.msra.mxu0 0.0
    %1354 = vmatprep.subr.mxu0 0.0
    %1355 = vmatpush1.msra.mxu0 0.0
    %1356 = vmatprep.subr.mxu0 0.0
    %1357 = vmatpush1.msra.mxu0 0.0
    %1358 = vmatprep.subr.mxu0 0.0
    %1359 = vmatpush1.msra.mxu0 0.0
    %1360 = vmatprep.subr.mxu0 0.0
    %1361 = vmatpush1.msra.mxu0 0.0
    %1362 = vmatprep.subr.mxu0 0.0
    %1363 = vmatpush1.msra.mxu0 0.0
    %1364 = vmatprep.subr.mxu0 0.0
    %1365 = vmatpush1.msra.mxu0 0.0
    %1366 = vmatprep.subr.mxu0 0.0
    %1367 = vmatpush1.msra.mxu0 0.0
    %1368 = vmatprep.subr.mxu0 0.0
    %1369 = vmatpush1.msra.mxu0 0.0
    %1370 = vmatprep.subr.mxu0 0.0
    %1371 = vmatpush1.msra.mxu0 0.0
    %1372 = vmatprep.subr.mxu0 0.0
    %1373 = vmatpush1.msra.mxu0 0.0
    %1374 = vmatprep.subr.mxu0 0.0
    %1375 = vmatpush1.msra.mxu0 0.0
    %1376 = vmatprep.subr.mxu0 0.0
    %1377 = vmatpush1.msra.mxu0 0.0
    %1378 = vmatprep.subr.mxu0 0.0
    %1379 = vmatpush1.msra.mxu0 0.0
    %1380 = vmatprep.subr.mxu0 0.0
    %1381 = vmatpush1.msra.mxu0 0.0
    %1382 = vmatprep.subr.mxu0 0.0
    %1383 = vmatpush1.msra.mxu0 0.0
    %1384 = vmatprep.subr.mxu0 0.0
    %1385 = vmatpush1.msra.mxu0 0.0
    %1386 = vmatprep.subr.mxu0 0.0
    %1387 = vmatpush1.msra.mxu0 0.0
    %1388 = vmatprep.mubr.f32.mxu0 0.0
    %1389 = vmatmul.mubr.f32.gmra.mrb[0].mxu0 %v1322
    %v1390 = vpop.f32.mrb[0].mxu0
    %v1391 = vadd.f32 0.0, %v1390
    %v1392 = vpop.f32.mrb[0].mxu0
    %1393 = vdwg.mxu0
    %v1394 = vmul.f32 %v1391, 0.001953125
    %v1395 = vlaneseq
    %v1396 = vshrl.u32 %v1395, 7
    %v1397 = vsub.s32 0, %v1396
    %v1398 = vrot.slane %v1394, %v1397
    %v1399 = vsub.f32 %v1296, %v1398
    %v1400 = vsub.f32 %v1297, %v1398
    %v1401 = vsub.f32 %v1298, %v1398
    %v1402 = vsub.f32 %v1299, %v1398
    %v1403 = vmul.f32 %v1399, %v1399
    %v1404 = vmul.f32 %v1400, %v1400
    %v1405 = vmul.f32 %v1401, %v1401
    %v1406 = vmul.f32 %v1402, %v1402
    %v1407 = vsel %vm133, %v1403, 0.0
    %v1408 = vsel %vm133, %v1404, 0.0
    %v1409 = vadd.f32 %v1407, %v1408
    %v1410 = vsel %vm133, %v1405, 0.0
    %v1411 = vadd.f32 %v1409, %v1410
    %v1412 = vsel %vm133, %v1406, 0.0
    %v1413 = vadd.f32 %v1411, %v1412
    %v1414 = vrot.slane %v1413, 4
    %v1415 = vadd.f32 %v1413, %v1414
    %v1416 = vrot.slane %v1415, 2
    %v1417 = vadd.f32 %v1415, %v1416
    %v1418 = vrot.slane %v1417, 1
    %v1419 = vadd.f32 %v1417, %v1418
    %v1421 = vsel %vm133, %v1419, 0
    %1423 = vmatprep.subr.mxu0 0.0
    %1424 = vmatpush1.msra.mxu0 %v1300
    %1425 = vmatprep.subr.mxu0 0.0
    %1426 = vmatpush1.msra.mxu0 %v1301
    %1427 = vmatprep.subr.mxu0 0.0
    %1428 = vmatpush1.msra.mxu0 %v1302
    %1429 = vmatprep.subr.mxu0 0.0
    %1430 = vmatpush1.msra.mxu0 %v1303
    %1431 = vmatprep.subr.mxu0 0.0
    %1432 = vmatpush1.msra.mxu0 %v1304
    %1433 = vmatprep.subr.mxu0 0.0
    %1434 = vmatpush1.msra.mxu0 %v1305
    %1435 = vmatprep.subr.mxu0 0.0
    %1436 = vmatpush1.msra.mxu0 %v1306
    %1437 = vmatprep.subr.mxu0 0.0
    %1438 = vmatpush1.msra.mxu0 %v1307
    %1439 = vmatprep.subr.mxu0 0.0
    %1440 = vmatpush1.msra.mxu0 0.0
    %1441 = vmatprep.subr.mxu0 0.0
    %1442 = vmatpush1.msra.mxu0 0.0
    %1443 = vmatprep.subr.mxu0 0.0
    %1444 = vmatpush1.msra.mxu0 0.0
    %1445 = vmatprep.subr.mxu0 0.0
    %1446 = vmatpush1.msra.mxu0 0.0
    %1447 = vmatprep.subr.mxu0 0.0
    %1448 = vmatpush1.msra.mxu0 0.0
    %1449 = vmatprep.subr.mxu0 0.0
    %1450 = vmatpush1.msra.mxu0 0.0
    %1451 = vmatprep.subr.mxu0 0.0
    %1452 = vmatpush1.msra.mxu0 0.0
    %1453 = vmatprep.subr.mxu0 0.0
    %1454 = vmatpush1.msra.mxu0 0.0
    %1455 = vmatprep.subr.mxu0 0.0
    %1456 = vmatpush1.msra.mxu0 0.0
    %1457 = vmatprep.subr.mxu0 0.0
    %1458 = vmatpush1.msra.mxu0 0.0
    %1459 = vmatprep.subr.mxu0 0.0
    %1460 = vmatpush1.msra.mxu0 0.0
    %1461 = vmatprep.subr.mxu0 0.0
    %1462 = vmatpush1.msra.mxu0 0.0
    %1463 = vmatprep.subr.mxu0 0.0
    %1464 = vmatpush1.msra.mxu0 0.0
    %1465 = vmatprep.subr.mxu0 0.0
    %1466 = vmatpush1.msra.mxu0 0.0
    %1467 = vmatprep.subr.mxu0 0.0
    %1468 = vmatpush1.msra.mxu0 0.0
    %1469 = vmatprep.subr.mxu0 0.0
    %1470 = vmatpush1.msra.mxu0 0.0
    %1471 = vmatprep.subr.mxu0 0.0
    %1472 = vmatpush1.msra.mxu0 0.0
    %1473 = vmatprep.subr.mxu0 0.0
    %1474 = vmatpush1.msra.mxu0 0.0
    %1475 = vmatprep.subr.mxu0 0.0
    %1476 = vmatpush1.msra.mxu0 0.0
    %1477 = vmatprep.subr.mxu0 0.0
    %1478 = vmatpush1.msra.mxu0 0.0
    %1479 = vmatprep.subr.mxu0 0.0
    %1480 = vmatpush1.msra.mxu0 0.0
    %1481 = vmatprep.subr.mxu0 0.0
    %1482 = vmatpush1.msra.mxu0 0.0
    %1483 = vmatprep.subr.mxu0 0.0
    %1484 = vmatpush1.msra.mxu0 0.0
    %1485 = vmatprep.subr.mxu0 0.0
    %1486 = vmatpush1.msra.mxu0 0.0
    %1487 = vmatprep.mubr.f32.mxu0 0.0
    %1488 = vmatmul.mubr.f32.gmra.mrb[0].mxu0 %v1421
    %v1489 = vpop.f32.mrb[0].mxu0
    %v1490 = vadd.f32 0.0, %v1489
    %v1491 = vpop.f32.mrb[0].mxu0
    %1492 = vdwg.mxu0
    %v1493 = vmul.f32 %v1490, 0.001953125
    %v1494 = vld [vmem:[%s6] sm:$0x1]
    %v1495 = vadd.f32 %v1493, 1e-05
    %v1496 = vrsqrt.pop %v1495
    %v1497 = vmul.f32 %v1494, %v1496
    %v1498 = vld [vmem:[%s7] sm:$0x1]
    %v1499 = vmul.f32 %v1394, %v1497
    %v1500 = vsub.f32 %v1498, %v1499
    %v1502 = vlaneseq
    %v1503 = vshrl.u32 %v1502, 7
    %v1504 = vsub.s32 0, %v1503
    %v1505 = vrot.slane %v1497, %v1504
    %v1507 = vmul.f32 %v1296, %v1505
    %v1508 = vmul.f32 %v1297, %v1505
    %v1509 = vmul.f32 %v1298, %v1505
    %v1510 = vmul.f32 %v1299, %v1505
    %v1512 = vlaneseq
    %v1513 = vshrl.u32 %v1512, 7
    %v1514 = vsub.s32 0, %v1513
    %v1515 = vrot.slane %v1500, %v1514
    %v1517 = vadd.f32 %v1507, %v1515
    %v1518 = vadd.f32 %v1508, %v1515
    %v1519 = vadd.f32 %v1509, %v1515
    %v1520 = vadd.f32 %v1510, %v1515
    %v1521 = vld [vmem:[#allocation4 + $0x1] sm:$0xff]
    %v1522 = vld [vmem:[#allocation4 + $0x9] sm:$0xff]
    %v1523 = vadd.f32 %v1521, %v1517
    %v1524 = vadd.f32 %v1522, %v1518
    %1525 = vst.msk [vmem:[#allocation12] sm:$0xff] %vm133, %v1523
    %1526 = vst.msk [vmem:[#allocation12 + $0x8] sm:$0xff] %vm133, %v1524
    %v1527 = vld [vmem:[#allocation4 + $0x13] sm:$0xff]
    %v1528 = vld [vmem:[#allocation4 + $0x1b] sm:$0xff]
    %v1529 = vadd.f32 %v1527, %v1519
    %v1530 = vadd.f32 %v1528, %v1520
    %1531 = vst.msk [vmem:[#allocation12 + $0x10] sm:$0xff] %vm133, %v1529
    %1532 = vst.msk [vmem:[#allocation12 + $0x18] sm:$0xff] %vm133, %v1530
    // Predicated region
    $region50: #{tpu_custom_call.1} parent=1 // pred_check
      _
    $region51: #{tpu_custom_call.1} parent=1 // pred_check_branch
      %1534 = sbr.rel (0) target = $region53
    $region52: #{tpu_custom_call.1} parent=1 // pred_region
      %s1536 = ssub.s32 512, 512
      %1537 = vsyncadd [#allocation6], %s1536
      %s1538 = sshll.u32 [#allocation12], 4
      %s1539 = int_to_ptr.vmem [resolvable:$true] %s1538
      %1544 = dma.vmem_to_hbm [thread:$0]  %s1539, 512, %s8, [#allocation6], 128, 128, 8
    $region53: #{tpu_custom_call.1} parent=1 // pred_fallthru
      _
    // Predicated region
    $region54: #{tpu_custom_call.1} parent=1 // pred_check
      _
    $region55: #{tpu_custom_call.1} parent=1 // pred_check_branch
      %1546 = sbr.rel (0) target = $region57
    $region56: #{tpu_custom_call.1} parent=1 // pred_region
      %1547 = dma.done [#allocation6], 512
    $region57: #{tpu_custom_call.1} parent=1 // pred_fallthru
      _
    %1548 = vsyncpa [#allocation5], 1
    %1549 = vsyncpa [#allocation8], 1
    %1550 = vsyncpa [#allocation11], 1
    %1551 = vsyncpa [#allocation6], 1

</llo_original>
